<compile_context>
chip_gen: v5e
topology: v5e:2x2
jax: 0.10.0
libtpu: 0.0.40
codegen_flags: <defaults>
</compile_context>

<pallas_src>
import numpy as np
import jax
import jax.numpy as jnp
from jax import lax
from jax.experimental import pallas as pl
from jax.experimental.pallas import tpu as pltpu

_EPS = 1e-5       # nn.BatchNorm1d default eps
_SLOPE = 0.01     # nn.LeakyReLU default negative_slope


def _round_up(x, m):
    return ((x + m - 1) // m) * m


# ---------------------------------------------------------------------------
# Mask construction (numpy glue, identical math to the PyTorch evan_mask)
# ---------------------------------------------------------------------------
def evan_mask(d_in, d_hid, rng):
    mask_in = np.ones((d_hid, d_in))
    degree_cnts = np.diff(np.concatenate(
        [[0], np.sort(rng.choice(np.arange(d_hid - 1) + 1, d_in - 2, replace=False)), [d_hid]]))
    cnt = 0
    for i_col, deg in enumerate(degree_cnts):
        cnt += deg
        mask_in[:cnt, i_col + 1] = 0
    mask_hid = np.ones((d_hid, d_hid))
    degree_cnts2 = np.diff(np.concatenate(
        [[0], np.sort(rng.choice(np.arange(d_hid - 1) + 1, d_in - 2, replace=False)), [d_hid]]))
    cnt1, cnt2 = 0, 0
    for deg1, deg2 in zip(degree_cnts, degree_cnts2):
        mask_hid[:cnt2, cnt1:cnt1 + deg1] = 0.0
        cnt1 += deg1
        cnt2 += deg2
    mask_out = np.zeros((d_in, d_hid))
    cnt = 0
    for i_row, deg in enumerate(degree_cnts2):
        cnt += deg
        mask_out[i_row + 1, :cnt] = 1
    prod = np.dot(np.dot(mask_out, mask_hid), mask_in)
    prod[prod > 1] = 1
    assert np.all(np.sum(prod, axis=1) == np.arange(d_in)), 'AR property violation'
    mask_out = np.concatenate([mask_out, mask_out], axis=0)
    return [m.astype(np.float32) for m in (mask_in, mask_hid, mask_out)]


# ---------------------------------------------------------------------------
# Pallas kernel: MADE 'direct' forward, 3-phase grid over batch tiles
# ---------------------------------------------------------------------------
def _make_made_kernel(p_pad):
    def made_kernel(x_ref, ones_ref, onehot_ref,
                    w1_ref, b1_ref, g1_ref, be1_ref,
                    w2_ref, b2_ref, g2_ref, be2_ref,
                    w3_ref, b3_ref,
                    out_ref,
                    sum1, sq1, sum2, sq2):
        phase = pl.program_id(0)   # 0: BN1 stats, 1: BN2 stats, 2: output
        tile = pl.program_id(1)    # batch tile

        @pl.when(jnp.logical_and(phase == 0, tile == 0))
        def _init():
            sum1[...] = jnp.zeros_like(sum1)
            sq1[...] = jnp.zeros_like(sq1)
            sum2[...] = jnp.zeros_like(sum2)
            sq2[...] = jnp.zeros_like(sq2)

        x = x_ref[...]                               # (TB, P) f32
        xb = x.astype(jnp.bfloat16)
        ones_m = ones_ref[...]                       # (1, TB): row_mask / B (f32)

        def lrelu(h):
            return jnp.maximum(h, _SLOPE * h)

        def affine_from_stats(mu, ex2, g, be):
            # One-pass variance with a clamp (E[h^2]-mu^2 can go slightly negative).
            var = jnp.maximum(ex2 - mu * mu, 0.0)
            s = lax.rsqrt(var + _EPS) * g
            t = be - mu * s
            return s, t

        # Layer 1 pre-BN activation (recomputed each phase; keeps h1 out of HBM).
        h1 = lrelu(jnp.dot(xb, w1_ref[...], preferred_element_type=jnp.float32)
                   + b1_ref[...])

        def layer2(h1n):
            return lrelu(jnp.dot(h1n.astype(jnp.bfloat16), w2_ref[...],
                                 preferred_element_type=jnp.float32) + b2_ref[...])

        @pl.when(phase == 0)
        def _phase0():
            # MXU-based batch stats: (1,TB) @ (TB,Hp); ones_m folds row mask and 1/B.
            sum1[...] += jnp.dot(ones_m, h1, preferred_element_type=jnp.float32)
            sq1[...] += jnp.dot(ones_m, h1 * h1, preferred_element_type=jnp.float32)
            out_ref[...] = jnp.zeros_like(out_ref)

        @pl.when(phase == 1)
        def _phase1():
            s1, t1 = affine_from_stats(sum1[...], sq1[...], g1_ref[...], be1_ref[...])
            h2 = layer2(h1 * s1 + t1)
            sum2[...] += jnp.dot(ones_m, h2, preferred_element_type=jnp.float32)
            sq2[...] += jnp.dot(ones_m, h2 * h2, preferred_element_type=jnp.float32)
            out_ref[...] = jnp.zeros_like(out_ref)

        @pl.when(phase == 2)
        def _phase2():
            s1, t1 = affine_from_stats(sum1[...], sq1[...], g1_ref[...], be1_ref[...])
            h2 = layer2(h1 * s1 + t1)
            s2, t2 = affine_from_stats(sum2[...], sq2[...], g2_ref[...], be2_ref[...])
            h2n = h2 * s2 + t2
            # Fused output head: one (TB,Hp)x(Hp,2P) matmul; slices are 128-aligned.
            y = jnp.dot(h2n.astype(jnp.bfloat16), w3_ref[...],
                        preferred_element_type=jnp.float32) + b3_ref[...]
            m = y[:, :p_pad]
            a = jnp.tanh(y[:, p_pad:])
            u = (x - m) * jnp.exp(-a)
            ld = -jnp.sum(a, axis=-1, keepdims=True)
            # Fold log-det into the spare padded column D (one-hot multiply-add);
            # single unmasked full-width lane-dense store.
            out_ref[...] = u + ld * onehot_ref[...]

    return made_kernel


def made_forward(x, params, *, batch_tile_max=512):
    """x: (B, D) f32.  Returns (u (B, D), -sum(a) (B, 1))."""
    B, D = x.shape
    (w1, b1, g1, be1, w2, b2, g2, be2, w3, b3) = params
    P, Hp = w1.shape                     # padded feature / hidden dims (mult. of 128)

    if B <= batch_tile_max:
        B_pad = _round_up(max(B, 8), 8)
        TB = B_pad
    else:
        TB = batch_tile_max              # multiple of 128 (lane dim of the ones row)
        B_pad = _round_up(B, TB)
    nbt = B_pad // TB

    # Lane/sublane-dense input slab + the two tiny precomputed constant rows.
    x_pad = jnp.zeros((B_pad, P), jnp.float32).at[:B, :D].set(x)
    ones_masked = jnp.zeros((1, B_pad), jnp.float32).at[0, :B].set(1.0 / B)
    onehot_ld = jnp.zeros((1, P), jnp.float32).at[0, D].set(1.0)

    const = lambda p, i: (0, 0)
    in_specs = [
        pl.BlockSpec((TB, P), lambda p, i: (i, 0)),   # x tile
        pl.BlockSpec((1, TB), lambda p, i: (0, i)),   # masked ones / B row
        pl.BlockSpec((1, P), const),                  # log-det one-hot column
        pl.BlockSpec((P, Hp), const),                 # w1 (resident, bf16)
        pl.BlockSpec((1, Hp), const),                 # b1
        pl.BlockSpec((1, Hp), const),                 # g1
        pl.BlockSpec((1, Hp), const),                 # be1
        pl.BlockSpec((Hp, Hp), const),                # w2 (resident, bf16)
        pl.BlockSpec((1, Hp), const),                 # b2
        pl.BlockSpec((1, Hp), const),                 # g2
        pl.BlockSpec((1, Hp), const),                 # be2
        pl.BlockSpec((Hp, 2 * P), const),             # fused output head (bf16)
        pl.BlockSpec((1, 2 * P), const),              # fused output bias
    ]
    out_spec = pl.BlockSpec((TB, P), lambda p, i: (i, 0))
    scratch = [pltpu.VMEM((1, Hp), jnp.float32) for _ in range(4)]

    args = (x_pad, ones_masked, onehot_ld,
            w1, b1, g1, be1, w2, b2, g2, be2, w3, b3)

    weight_bytes = sum(int(np.prod(a.shape)) * a.dtype.itemsize
                       for a in (w1, b1, g1, be1, w2, b2, g2, be2, w3, b3))
    tile_io_bytes = 2 * TB * P * 4                     # x tile + out tile
    need = 2 * weight_bytes + 2 * tile_io_bytes + 4 * Hp * 4 + (4 << 20)
    try:
        cap = pltpu.get_tpu_info().vmem_capacity_bytes
    except Exception:  # pragma: no cover - conservative fallback
        cap = 64 << 20
    vmem_limit = int(min(max(need, 16 << 20), cap - (8 << 20)))

    flops = int(3 * 2 * B_pad * P * Hp          # layer-1 matmul (recomputed per phase)
                + 2 * 2 * B_pad * Hp * Hp       # layer-2 matmul (phases 1 & 2)
                + 2 * B_pad * Hp * (2 * P)      # fused output head
                + 4 * 2 * B_pad * Hp)           # MXU batch-stat dots
    transcendentals = int(2 * B_pad * P + 4 * 2 * nbt * Hp)   # tanh+exp, rsqrt
    bytes_accessed = int(3 * B_pad * P * 4      # x read per phase
                         + 3 * B_pad * P * 4    # out writebacks (one per phase)
                         + weight_bytes + B_pad * 4 + P * 4)
    cost = pl.CostEstimate(flops=flops, transcendentals=transcendentals,
                           bytes_accessed=bytes_accessed)

    slab = pl.pallas_call(
        _make_made_kernel(P),
        out_shape=jax.ShapeDtypeStruct((B_pad, P), jnp.float32),
        grid_spec=pltpu.PrefetchScalarGridSpec(
            num_scalar_prefetch=0,
            grid=(3, nbt),                      # (phase, batch tile) — phase outermost
            in_specs=in_specs,
            out_specs=out_spec,
            scratch_shapes=scratch),
        compiler_params=pltpu.CompilerParams(
            dimension_semantics=("arbitrary", "arbitrary"),
            vmem_limit_bytes=vmem_limit),
        cost_estimate=cost,
    )(*args)

    u = slab[:B, :D]
    logdet = slab[:B, D:D + 1]
    return u, logdet


# ---------------------------------------------------------------------------
# Plain-JAX f32 reference (unpadded parameters, for correctness check)
# ---------------------------------------------------------------------------
def made_ref(x, ref_params):
    w1t, b1, g1, be1, w2t, b2, g2, be2, w3mt, b3m, w3at, b3a = ref_params
    h = x @ w1t + b1
    h = jnp.where(h > 0, h, _SLOPE * h)
    mu = h.mean(0, keepdims=True); var = ((h - mu) ** 2).mean(0, keepdims=True)
    h = (h - mu) / jnp.sqrt(var + _EPS) * g1 + be1
    h = h @ w2t + b2
    h = jnp.where(h > 0, h, _SLOPE * h)
    mu = h.mean(0, keepdims=True); var = ((h - mu) ** 2).mean(0, keepdims=True)
    h = (h - mu) / jnp.sqrt(var + _EPS) * g2 + be2
    m = h @ w3mt + b3m
    a = jnp.tanh(h @ w3at + b3a)
    return (x - m) * jnp.exp(-a), -a.sum(-1, keepdims=True)


# ---------------------------------------------------------------------------
# Deterministic parameter setup: mask, pre-transpose, pad lane-dense, bf16 weights
# ---------------------------------------------------------------------------
def init_made_params(num_inputs, num_hidden, key):
    D, H = num_inputs, num_hidden
    mask_in, mask_hid, mask_out = evan_mask(D, H, np.random.default_rng(0))
    k = jax.random.split(key, 3)

    def linear_init(kk, out_f, in_f):
        bound = 1.0 / np.sqrt(in_f)
        w = jax.random.uniform(kk, (out_f, in_f), jnp.float32, -bound, bound)
        b = jax.random.uniform(jax.random.fold_in(kk, 1), (out_f,),
                               jnp.float32, -bound, bound)
        return np.asarray(w), np.asarray(b)

    w1, b1 = linear_init(k[0], H, D)
    w2, b2 = linear_init(k[1], H, H)
    w3, b3 = linear_init(k[2], 2 * D, H)

    # Pre-mask, pre-transpose to (in_features, out_features).
    w1t = (w1 * mask_in).T                            # (D, H)
    w2t = (w2 * mask_hid).T                           # (H, H)
    w3m_t = (w3[:D] * mask_out[:D]).T                 # (H, D)  m-head
    w3a_t = (w3[D:] * mask_out[D:]).T                 # (H, D)  a-head
    b3m, b3a = b3[:D], b3[D:]
    g1 = np.ones(H, np.float32); be1 = np.zeros(H, np.float32)
    g2 = np.ones(H, np.float32); be2 = np.zeros(H, np.float32)

    # Padded (lane-dense) shapes: P leaves a spare column (index D) for the log-det.
    P = _round_up(D + 1, 128)
    Hp = _round_up(H, 128)

    def pad2(m, r, c):
        out = np.zeros((r, c), np.float32)
        out[:m.shape[0], :m.shape[1]] = m
        return out

    def pad_row(v, c, fill=0.0):
        out = np.full((1, c), fill, np.float32)
        out[0, :v.shape[0]] = v
        return out

    # Fused output head: columns [0:D] = m-head, [P:P+D] = a-head, rest zero.
    w3_fused = np.zeros((Hp, 2 * P), np.float32)
    w3_fused[:H, :D] = w3m_t
    w3_fused[:H, P:P + D] = w3a_t
    b3_fused = np.zeros((1, 2 * P), np.float32)
    b3_fused[0, :D] = b3m
    b3_fused[0, P:P + D] = b3a

    kernel_params = (
        jnp.asarray(pad2(w1t, P, Hp), jnp.bfloat16),
        jnp.asarray(pad_row(b1, Hp)),
        jnp.asarray(pad_row(g1, Hp, 1.0)),
        jnp.asarray(pad_row(be1, Hp)),
        jnp.asarray(pad2(w2t, Hp, Hp), jnp.bfloat16),
        jnp.asarray(pad_row(b2, Hp)),
        jnp.asarray(pad_row(g2, Hp, 1.0)),
        jnp.asarray(pad_row(be2, Hp)),
        jnp.asarray(w3_fused, jnp.bfloat16),
        jnp.asarray(b3_fused),
    )

    ref_params = tuple(jnp.asarray(a) for a in (
        w1t, b1.reshape(1, H), g1.reshape(1, H), be1.reshape(1, H),
        w2t, b2.reshape(1, H), g2.reshape(1, H), be2.reshape(1, H),
        w3m_t, b3m.reshape(1, D), w3a_t, b3a.reshape(1, D),
    ))
    return kernel_params, ref_params


if __name__ == "__main__":
    # Small demo shapes; batch=64 keeps the (training-mode) BatchNorm stats sane.
    num_inputs, num_hidden, batch = 8, 32, 64
    key = jax.random.PRNGKey(0)
    kx, kp = jax.random.split(key)

    x = jax.random.normal(kx, (batch, num_inputs), jnp.float32)
    kernel_params, ref_params = init_made_params(num_inputs, num_hidden, kp)

    u, logdet = jax.block_until_ready(made_forward(x, kernel_params))

    u_ref, ld_ref = made_ref(x, ref_params)
    assert u.shape == (batch, num_inputs) and logdet.shape == (batch, 1)
    # Loose tolerance: kernel matmuls run in bf16 on the MXU (f32 accumulation),
    # reference is pure f32.
    np.testing.assert_allclose(np.asarray(u), np.asarray(u_ref), rtol=1e-1, atol=1e-1)
    np.testing.assert_allclose(np.asarray(logdet), np.asarray(ld_ref), rtol=1e-1, atol=1e-1)

    print("KERNEL_OK")
</pallas_src>

<mosaic_0001>
module attributes {stable_mosaic.version = 11 : i64} {
  func.func @made_kernel(%arg0: i32, %arg1: i32, %arg2: memref<64x128xf32, #tpu.memory_space<vmem>>, %arg3: memref<1x64xf32, #tpu.memory_space<vmem>>, %arg4: memref<1x128xf32, #tpu.memory_space<vmem>>, %arg5: memref<128x128xbf16, #tpu.memory_space<vmem>>, %arg6: memref<1x128xf32, #tpu.memory_space<vmem>>, %arg7: memref<1x128xf32, #tpu.memory_space<vmem>>, %arg8: memref<1x128xf32, #tpu.memory_space<vmem>>, %arg9: memref<128x128xbf16, #tpu.memory_space<vmem>>, %arg10: memref<1x128xf32, #tpu.memory_space<vmem>>, %arg11: memref<1x128xf32, #tpu.memory_space<vmem>>, %arg12: memref<1x128xf32, #tpu.memory_space<vmem>>, %arg13: memref<128x256xbf16, #tpu.memory_space<vmem>>, %arg14: memref<1x256xf32, #tpu.memory_space<vmem>>, %arg15: memref<64x128xf32, #tpu.memory_space<vmem>>, %arg16: memref<1x128xf32, #tpu.memory_space<vmem>>, %arg17: memref<1x128xf32, #tpu.memory_space<vmem>>, %arg18: memref<1x128xf32, #tpu.memory_space<vmem>>, %arg19: memref<1x128xf32, #tpu.memory_space<vmem>>) attributes {dimension_semantics = [#tpu.dimension_semantics<arbitrary>, #tpu.dimension_semantics<arbitrary>], iteration_bounds = array<i64: 3, 1>, scalar_prefetch = 0 : i64, scratch_operands = 4 : i64, tpu.core_type = #tpu.core_type<tc>, window_params = [{transform_indices = @transform_0, window_bounds = array<i64: 64, 128>}, {transform_indices = @transform_1, window_bounds = array<i64: 1, 64>}, {pipeline_mode = #tpu.pipeline_mode<synchronous>, transform_indices = @transform_2, window_bounds = array<i64: 1, 128>}, {pipeline_mode = #tpu.pipeline_mode<synchronous>, transform_indices = @transform_3, window_bounds = array<i64: 128, 128>}, {pipeline_mode = #tpu.pipeline_mode<synchronous>, transform_indices = @transform_4, window_bounds = array<i64: 1, 128>}, {pipeline_mode = #tpu.pipeline_mode<synchronous>, transform_indices = @transform_5, window_bounds = array<i64: 1, 128>}, {pipeline_mode = #tpu.pipeline_mode<synchronous>, transform_indices = @transform_6, window_bounds = array<i64: 1, 128>}, {pipeline_mode = #tpu.pipeline_mode<synchronous>, transform_indices = @transform_7, window_bounds = array<i64: 128, 128>}, {pipeline_mode = #tpu.pipeline_mode<synchronous>, transform_indices = @transform_8, window_bounds = array<i64: 1, 128>}, {pipeline_mode = #tpu.pipeline_mode<synchronous>, transform_indices = @transform_9, window_bounds = array<i64: 1, 128>}, {pipeline_mode = #tpu.pipeline_mode<synchronous>, transform_indices = @transform_10, window_bounds = array<i64: 1, 128>}, {pipeline_mode = #tpu.pipeline_mode<synchronous>, transform_indices = @transform_11, window_bounds = array<i64: 128, 256>}, {pipeline_mode = #tpu.pipeline_mode<synchronous>, transform_indices = @transform_12, window_bounds = array<i64: 1, 256>}, {transform_indices = @transform_13, window_bounds = array<i64: 64, 128>}]} {
    %c0_i32 = arith.constant 0 : i32
    %0 = arith.cmpi eq, %arg0, %c0_i32 : i32
    %c0_i32_0 = arith.constant 0 : i32
    %1 = arith.cmpi eq, %arg1, %c0_i32_0 : i32
    %2 = arith.andi %0, %1 : i1
    %3 = arith.extui %2 : i1 to i32
    %c0_i32_1 = arith.constant 0 : i32
    %4 = arith.cmpi ne, %3, %c0_i32_1 : i32
    scf.if %4 {
      %cst_14 = arith.constant 0.000000e+00 : f32
      %25 = vector.broadcast %cst_14 : f32 to vector<1x128xf32>
      %c0_15 = arith.constant 0 : index
      %c0_16 = arith.constant 0 : index
      %26 = vector.load %arg16[%c0_15, %c0_16] : memref<1x128xf32, #tpu.memory_space<vmem>>, vector<1x128xf32>
      tpu.vector_store %arg16[%c0_15, %c0_16], %25 {strides = array<i32>} : memref<1x128xf32, #tpu.memory_space<vmem>>, vector<1x128xf32>,
      %cst_17 = arith.constant 0.000000e+00 : f32
      %27 = vector.broadcast %cst_17 : f32 to vector<1x128xf32>
      %c0_18 = arith.constant 0 : index
      %c0_19 = arith.constant 0 : index
      %28 = vector.load %arg17[%c0_18, %c0_19] : memref<1x128xf32, #tpu.memory_space<vmem>>, vector<1x128xf32>
      tpu.vector_store %arg17[%c0_18, %c0_19], %27 {strides = array<i32>} : memref<1x128xf32, #tpu.memory_space<vmem>>, vector<1x128xf32>,
      %cst_20 = arith.constant 0.000000e+00 : f32
      %29 = vector.broadcast %cst_20 : f32 to vector<1x128xf32>
      %c0_21 = arith.constant 0 : index
      %c0_22 = arith.constant 0 : index
      %30 = vector.load %arg18[%c0_21, %c0_22] : memref<1x128xf32, #tpu.memory_space<vmem>>, vector<1x128xf32>
      tpu.vector_store %arg18[%c0_21, %c0_22], %29 {strides = array<i32>} : memref<1x128xf32, #tpu.memory_space<vmem>>, vector<1x128xf32>,
      %cst_23 = arith.constant 0.000000e+00 : f32
      %31 = vector.broadcast %cst_23 : f32 to vector<1x128xf32>
      %c0_24 = arith.constant 0 : index
      %c0_25 = arith.constant 0 : index
      %32 = vector.load %arg19[%c0_24, %c0_25] : memref<1x128xf32, #tpu.memory_space<vmem>>, vector<1x128xf32>
      tpu.vector_store %arg19[%c0_24, %c0_25], %31 {strides = array<i32>} : memref<1x128xf32, #tpu.memory_space<vmem>>, vector<1x128xf32>,
    } else {
    }
    %c0 = arith.constant 0 : index
    %c0_2 = arith.constant 0 : index
    %5 = vector.load %arg2[%c0, %c0_2] : memref<64x128xf32, #tpu.memory_space<vmem>>, vector<64x128xf32>
    %6 = arith.truncf %5 : vector<64x128xf32> to vector<64x128xbf16>
    %c0_3 = arith.constant 0 : index
    %c0_4 = arith.constant 0 : index
    %7 = vector.load %arg3[%c0_3, %c0_4] : memref<1x64xf32, #tpu.memory_space<vmem>>, vector<1x64xf32>
    %c0_5 = arith.constant 0 : index
    %c0_6 = arith.constant 0 : index
    %8 = vector.load %arg5[%c0_5, %c0_6] : memref<128x128xbf16, #tpu.memory_space<vmem>>, vector<128x128xbf16>
    %cst = arith.constant dense<0.000000e+00> : vector<64x128xf32>
    %9 = tpu.matmul %6, %8, %cst {dimension_numbers = #tpu.dot_dimension_numbers<[1], [0], [0], [1], [0, 0, 1, 1], [], []>} : vector<64x128xbf16>, vector<128x128xbf16>, vector<64x128xf32> -> vector<64x128xf32>
    %c0_7 = arith.constant 0 : index
    %c0_8 = arith.constant 0 : index
    %10 = vector.load %arg6[%c0_7, %c0_8] : memref<1x128xf32, #tpu.memory_space<vmem>>, vector<1x128xf32>
    %11 = vector.broadcast %10 : vector<1x128xf32> to vector<64x128xf32>
    %12 = arith.addf %9, %11 : vector<64x128xf32>
    %cst_9 = arith.constant 0.00999999977 : f32
    %13 = vector.broadcast %cst_9 : f32 to vector<64x128xf32>
    %14 = arith.mulf %13, %12 : vector<64x128xf32>
    %15 = arith.maximumf %12, %14 : vector<64x128xf32>
    %c0_i32_10 = arith.constant 0 : i32
    %16 = arith.cmpi eq, %arg0, %c0_i32_10 : i32
    %17 = arith.extui %16 : i1 to i32
    %c0_i32_11 = arith.constant 0 : i32
    %18 = arith.cmpi ne, %17, %c0_i32_11 : i32
    scf.if %18 {
      %c0_14 = arith.constant 0 : index
      %c0_15 = arith.constant 0 : index
      %25 = vector.load %arg16[%c0_14, %c0_15] : memref<1x128xf32, #tpu.memory_space<vmem>>, vector<1x128xf32>
      %cst_16 = arith.constant dense<0.000000e+00> : vector<1x128xf32>
      %26 = tpu.matmul %7, %15, %cst_16 {dimension_numbers = #tpu.dot_dimension_numbers<[1], [0], [0], [1], [0, 0, 1, 1], [], []>} : vector<1x64xf32>, vector<64x128xf32>, vector<1x128xf32> -> vector<1x128xf32>
      %27 = arith.addf %25, %26 : vector<1x128xf32>
      %c0_17 = arith.constant 0 : index
      %c0_18 = arith.constant 0 : index
      %28 = vector.load %arg16[%c0_17, %c0_18] : memref<1x128xf32, #tpu.memory_space<vmem>>, vector<1x128xf32>
      tpu.vector_store %arg16[%c0_17, %c0_18], %27 {strides = array<i32>} : memref<1x128xf32, #tpu.memory_space<vmem>>, vector<1x128xf32>,
      %c0_19 = arith.constant 0 : index
      %c0_20 = arith.constant 0 : index
      %29 = vector.load %arg17[%c0_19, %c0_20] : memref<1x128xf32, #tpu.memory_space<vmem>>, vector<1x128xf32>
      %30 = arith.mulf %15, %15 : vector<64x128xf32>
      %cst_21 = arith.constant dense<0.000000e+00> : vector<1x128xf32>
      %31 = tpu.matmul %7, %30, %cst_21 {dimension_numbers = #tpu.dot_dimension_numbers<[1], [0], [0], [1], [0, 0, 1, 1], [], []>} : vector<1x64xf32>, vector<64x128xf32>, vector<1x128xf32> -> vector<1x128xf32>
      %32 = arith.addf %29, %31 : vector<1x128xf32>
      %c0_22 = arith.constant 0 : index
      %c0_23 = arith.constant 0 : index
      %33 = vector.load %arg17[%c0_22, %c0_23] : memref<1x128xf32, #tpu.memory_space<vmem>>, vector<1x128xf32>
      tpu.vector_store %arg17[%c0_22, %c0_23], %32 {strides = array<i32>} : memref<1x128xf32, #tpu.memory_space<vmem>>, vector<1x128xf32>,
      %cst_24 = arith.constant 0.000000e+00 : f32
      %34 = vector.broadcast %cst_24 : f32 to vector<64x128xf32>
      %c0_25 = arith.constant 0 : index
      %c0_26 = arith.constant 0 : index
      %35 = vector.load %arg15[%c0_25, %c0_26] : memref<64x128xf32, #tpu.memory_space<vmem>>, vector<64x128xf32>
      tpu.vector_store %arg15[%c0_25, %c0_26], %34 {strides = array<i32>} : memref<64x128xf32, #tpu.memory_space<vmem>>, vector<64x128xf32>,
    } else {
    }
    %c1_i32 = arith.constant 1 : i32
    %19 = arith.cmpi eq, %arg0, %c1_i32 : i32
    %20 = arith.extui %19 : i1 to i32
    %c0_i32_12 = arith.constant 0 : i32
    %21 = arith.cmpi ne, %20, %c0_i32_12 : i32
    scf.if %21 {
      %c0_14 = arith.constant 0 : index
      %c0_15 = arith.constant 0 : index
      %25 = vector.load %arg16[%c0_14, %c0_15] : memref<1x128xf32, #tpu.memory_space<vmem>>, vector<1x128xf32>
      %c0_16 = arith.constant 0 : index
      %c0_17 = arith.constant 0 : index
      %26 = vector.load %arg17[%c0_16, %c0_17] : memref<1x128xf32, #tpu.memory_space<vmem>>, vector<1x128xf32>
      %c0_18 = arith.constant 0 : index
      %c0_19 = arith.constant 0 : index
      %27 = vector.load %arg7[%c0_18, %c0_19] : memref<1x128xf32, #tpu.memory_space<vmem>>, vector<1x128xf32>
      %c0_20 = arith.constant 0 : index
      %c0_21 = arith.constant 0 : index
      %28 = vector.load %arg8[%c0_20, %c0_21] : memref<1x128xf32, #tpu.memory_space<vmem>>, vector<1x128xf32>
      %29 = arith.mulf %25, %25 : vector<1x128xf32>
      %30 = arith.subf %26, %29 : vector<1x128xf32>
      %cst_22 = arith.constant 0.000000e+00 : f32
      %31 = vector.broadcast %cst_22 : f32 to vector<1x128xf32>
      %32 = arith.maximumf %30, %31 : vector<1x128xf32>
      %cst_23 = arith.constant 9.99999974E-6 : f32
      %33 = vector.broadcast %cst_23 : f32 to vector<1x128xf32>
      %34 = arith.addf %32, %33 : vector<1x128xf32>
      %35 = math.rsqrt %34 : vector<1x128xf32>
      %36 = arith.mulf %35, %27 : vector<1x128xf32>
      %37 = arith.mulf %25, %36 : vector<1x128xf32>
      %38 = arith.subf %28, %37 : vector<1x128xf32>
      %39 = vector.broadcast %36 : vector<1x128xf32> to vector<64x128xf32>
      %40 = arith.mulf %15, %39 : vector<64x128xf32>
      %41 = vector.broadcast %38 : vector<1x128xf32> to vector<64x128xf32>
      %42 = arith.addf %40, %41 : vector<64x128xf32>
      %43 = arith.truncf %42 : vector<64x128xf32> to vector<64x128xbf16>
      %c0_24 = arith.constant 0 : index
      %c0_25 = arith.constant 0 : index
      %44 = vector.load %arg9[%c0_24, %c0_25] : memref<128x128xbf16, #tpu.memory_space<vmem>>, vector<128x128xbf16>
      %cst_26 = arith.constant dense<0.000000e+00> : vector<64x128xf32>
      %45 = tpu.matmul %43, %44, %cst_26 {dimension_numbers = #tpu.dot_dimension_numbers<[1], [0], [0], [1], [0, 0, 1, 1], [], []>} : vector<64x128xbf16>, vector<128x128xbf16>, vector<64x128xf32> -> vector<64x128xf32>
      %c0_27 = arith.constant 0 : index
      %c0_28 = arith.constant 0 : index
      %46 = vector.load %arg10[%c0_27, %c0_28] : memref<1x128xf32, #tpu.memory_space<vmem>>, vector<1x128xf32>
      %47 = vector.broadcast %46 : vector<1x128xf32> to vector<64x128xf32>
      %48 = arith.addf %45, %47 : vector<64x128xf32>
      %cst_29 = arith.constant 0.00999999977 : f32
      %49 = vector.broadcast %cst_29 : f32 to vector<64x128xf32>
      %50 = arith.mulf %49, %48 : vector<64x128xf32>
      %51 = arith.maximumf %48, %50 : vector<64x128xf32>
      %c0_30 = arith.constant 0 : index
      %c0_31 = arith.constant 0 : index
      %52 = vector.load %arg18[%c0_30, %c0_31] : memref<1x128xf32, #tpu.memory_space<vmem>>, vector<1x128xf32>
      %cst_32 = arith.constant dense<0.000000e+00> : vector<1x128xf32>
      %53 = tpu.matmul %7, %51, %cst_32 {dimension_numbers = #tpu.dot_dimension_numbers<[1], [0], [0], [1], [0, 0, 1, 1], [], []>} : vector<1x64xf32>, vector<64x128xf32>, vector<1x128xf32> -> vector<1x128xf32>
      %54 = arith.addf %52, %53 : vector<1x128xf32>
      %c0_33 = arith.constant 0 : index
      %c0_34 = arith.constant 0 : index
      %55 = vector.load %arg18[%c0_33, %c0_34] : memref<1x128xf32, #tpu.memory_space<vmem>>, vector<1x128xf32>
      tpu.vector_store %arg18[%c0_33, %c0_34], %54 {strides = array<i32>} : memref<1x128xf32, #tpu.memory_space<vmem>>, vector<1x128xf32>,
      %c0_35 = arith.constant 0 : index
      %c0_36 = arith.constant 0 : index
      %56 = vector.load %arg19[%c0_35, %c0_36] : memref<1x128xf32, #tpu.memory_space<vmem>>, vector<1x128xf32>
      %57 = arith.mulf %51, %51 : vector<64x128xf32>
      %cst_37 = arith.constant dense<0.000000e+00> : vector<1x128xf32>
      %58 = tpu.matmul %7, %57, %cst_37 {dimension_numbers = #tpu.dot_dimension_numbers<[1], [0], [0], [1], [0, 0, 1, 1], [], []>} : vector<1x64xf32>, vector<64x128xf32>, vector<1x128xf32> -> vector<1x128xf32>
      %59 = arith.addf %56, %58 : vector<1x128xf32>
      %c0_38 = arith.constant 0 : index
      %c0_39 = arith.constant 0 : index
      %60 = vector.load %arg19[%c0_38, %c0_39] : memref<1x128xf32, #tpu.memory_space<vmem>>, vector<1x128xf32>
      tpu.vector_store %arg19[%c0_38, %c0_39], %59 {strides = array<i32>} : memref<1x128xf32, #tpu.memory_space<vmem>>, vector<1x128xf32>,
      %cst_40 = arith.constant 0.000000e+00 : f32
      %61 = vector.broadcast %cst_40 : f32 to vector<64x128xf32>
      %c0_41 = arith.constant 0 : index
      %c0_42 = arith.constant 0 : index
      %62 = vector.load %arg15[%c0_41, %c0_42] : memref<64x128xf32, #tpu.memory_space<vmem>>, vector<64x128xf32>
      tpu.vector_store %arg15[%c0_41, %c0_42], %61 {strides = array<i32>} : memref<64x128xf32, #tpu.memory_space<vmem>>, vector<64x128xf32>,
    } else {
    }
    %c2_i32 = arith.constant 2 : i32
    %22 = arith.cmpi eq, %arg0, %c2_i32 : i32
    %23 = arith.extui %22 : i1 to i32
    %c0_i32_13 = arith.constant 0 : i32
    %24 = arith.cmpi ne, %23, %c0_i32_13 : i32
    scf.if %24 {
      %c0_14 = arith.constant 0 : index
      %c0_15 = arith.constant 0 : index
      %25 = vector.load %arg16[%c0_14, %c0_15] : memref<1x128xf32, #tpu.memory_space<vmem>>, vector<1x128xf32>
      %c0_16 = arith.constant 0 : index
      %c0_17 = arith.constant 0 : index
      %26 = vector.load %arg17[%c0_16, %c0_17] : memref<1x128xf32, #tpu.memory_space<vmem>>, vector<1x128xf32>
      %c0_18 = arith.constant 0 : index
      %c0_19 = arith.constant 0 : index
      %27 = vector.load %arg7[%c0_18, %c0_19] : memref<1x128xf32, #tpu.memory_space<vmem>>, vector<1x128xf32>
      %c0_20 = arith.constant 0 : index
      %c0_21 = arith.constant 0 : index
      %28 = vector.load %arg8[%c0_20, %c0_21] : memref<1x128xf32, #tpu.memory_space<vmem>>, vector<1x128xf32>
      %29 = arith.mulf %25, %25 : vector<1x128xf32>
      %30 = arith.subf %26, %29 : vector<1x128xf32>
      %cst_22 = arith.constant 0.000000e+00 : f32
      %31 = vector.broadcast %cst_22 : f32 to vector<1x128xf32>
      %32 = arith.maximumf %30, %31 : vector<1x128xf32>
      %cst_23 = arith.constant 9.99999974E-6 : f32
      %33 = vector.broadcast %cst_23 : f32 to vector<1x128xf32>
      %34 = arith.addf %32, %33 : vector<1x128xf32>
      %35 = math.rsqrt %34 : vector<1x128xf32>
      %36 = arith.mulf %35, %27 : vector<1x128xf32>
      %37 = arith.mulf %25, %36 : vector<1x128xf32>
      %38 = arith.subf %28, %37 : vector<1x128xf32>
      %39 = vector.broadcast %36 : vector<1x128xf32> to vector<64x128xf32>
      %40 = arith.mulf %15, %39 : vector<64x128xf32>
      %41 = vector.broadcast %38 : vector<1x128xf32> to vector<64x128xf32>
      %42 = arith.addf %40, %41 : vector<64x128xf32>
      %43 = arith.truncf %42 : vector<64x128xf32> to vector<64x128xbf16>
      %c0_24 = arith.constant 0 : index
      %c0_25 = arith.constant 0 : index
      %44 = vector.load %arg9[%c0_24, %c0_25] : memref<128x128xbf16, #tpu.memory_space<vmem>>, vector<128x128xbf16>
      %cst_26 = arith.constant dense<0.000000e+00> : vector<64x128xf32>
      %45 = tpu.matmul %43, %44, %cst_26 {dimension_numbers = #tpu.dot_dimension_numbers<[1], [0], [0], [1], [0, 0, 1, 1], [], []>} : vector<64x128xbf16>, vector<128x128xbf16>, vector<64x128xf32> -> vector<64x128xf32>
      %c0_27 = arith.constant 0 : index
      %c0_28 = arith.constant 0 : index
      %46 = vector.load %arg10[%c0_27, %c0_28] : memref<1x128xf32, #tpu.memory_space<vmem>>, vector<1x128xf32>
      %47 = vector.broadcast %46 : vector<1x128xf32> to vector<64x128xf32>
      %48 = arith.addf %45, %47 : vector<64x128xf32>
      %cst_29 = arith.constant 0.00999999977 : f32
      %49 = vector.broadcast %cst_29 : f32 to vector<64x128xf32>
      %50 = arith.mulf %49, %48 : vector<64x128xf32>
      %51 = arith.maximumf %48, %50 : vector<64x128xf32>
      %c0_30 = arith.constant 0 : index
      %c0_31 = arith.constant 0 : index
      %52 = vector.load %arg18[%c0_30, %c0_31] : memref<1x128xf32, #tpu.memory_space<vmem>>, vector<1x128xf32>
      %c0_32 = arith.constant 0 : index
      %c0_33 = arith.constant 0 : index
      %53 = vector.load %arg19[%c0_32, %c0_33] : memref<1x128xf32, #tpu.memory_space<vmem>>, vector<1x128xf32>
      %c0_34 = arith.constant 0 : index
      %c0_35 = arith.constant 0 : index
      %54 = vector.load %arg11[%c0_34, %c0_35] : memref<1x128xf32, #tpu.memory_space<vmem>>, vector<1x128xf32>
      %c0_36 = arith.constant 0 : index
      %c0_37 = arith.constant 0 : index
      %55 = vector.load %arg12[%c0_36, %c0_37] : memref<1x128xf32, #tpu.memory_space<vmem>>, vector<1x128xf32>
      %56 = arith.mulf %52, %52 : vector<1x128xf32>
      %57 = arith.subf %53, %56 : vector<1x128xf32>
      %cst_38 = arith.constant 0.000000e+00 : f32
      %58 = vector.broadcast %cst_38 : f32 to vector<1x128xf32>
      %59 = arith.maximumf %57, %58 : vector<1x128xf32>
      %cst_39 = arith.constant 9.99999974E-6 : f32
      %60 = vector.broadcast %cst_39 : f32 to vector<1x128xf32>
      %61 = arith.addf %59, %60 : vector<1x128xf32>
      %62 = math.rsqrt %61 : vector<1x128xf32>
      %63 = arith.mulf %62, %54 : vector<1x128xf32>
      %64 = arith.mulf %52, %63 : vector<1x128xf32>
      %65 = arith.subf %55, %64 : vector<1x128xf32>
      %66 = vector.broadcast %63 : vector<1x128xf32> to vector<64x128xf32>
      %67 = arith.mulf %51, %66 : vector<64x128xf32>
      %68 = vector.broadcast %65 : vector<1x128xf32> to vector<64x128xf32>
      %69 = arith.addf %67, %68 : vector<64x128xf32>
      %70 = arith.truncf %69 : vector<64x128xf32> to vector<64x128xbf16>
      %c0_40 = arith.constant 0 : index
      %c0_41 = arith.constant 0 : index
      %71 = vector.load %arg13[%c0_40, %c0_41] : memref<128x256xbf16, #tpu.memory_space<vmem>>, vector<128x256xbf16>
      %cst_42 = arith.constant dense<0.000000e+00> : vector<64x256xf32>
      %72 = tpu.matmul %70, %71, %cst_42 {dimension_numbers = #tpu.dot_dimension_numbers<[1], [0], [0], [1], [0, 0, 1, 1], [], []>} : vector<64x128xbf16>, vector<128x256xbf16>, vector<64x256xf32> -> vector<64x256xf32>
      %c0_43 = arith.constant 0 : index
      %c0_44 = arith.constant 0 : index
      %73 = vector.load %arg14[%c0_43, %c0_44] : memref<1x256xf32, #tpu.memory_space<vmem>>, vector<1x256xf32>
      %74 = vector.broadcast %73 : vector<1x256xf32> to vector<64x256xf32>
      %75 = arith.addf %72, %74 : vector<64x256xf32>
      %76 = vector.extract_strided_slice %75 {offsets = [0, 0], sizes = [64, 128], strides = [1, 1]} : vector<64x256xf32> to vector<64x128xf32>
      %77 = vector.extract_strided_slice %75 {offsets = [0, 128], sizes = [64, 128], strides = [1, 1]} : vector<64x256xf32> to vector<64x128xf32>
      %78 = math.tanh %77 : vector<64x128xf32>
      %79 = arith.subf %5, %76 : vector<64x128xf32>
      %cst_45 = arith.constant 0.000000e+00 : f32
      %80 = vector.broadcast %cst_45 : f32 to vector<64x128xf32>
      %81 = arith.subf %80, %78 : vector<64x128xf32>
      %82 = math.exp %81 : vector<64x128xf32>
      %83 = arith.mulf %79, %82 : vector<64x128xf32>
      %cst_46 = arith.constant dense<0.000000e+00> : vector<64xf32>
      %84 = vector.multi_reduction <add>, %78, %cst_46 [1] : vector<64x128xf32> to vector<64xf32>
      %85 = vector.shape_cast %84 : vector<64xf32> to vector<64x1xf32>
      %cst_47 = arith.constant 0.000000e+00 : f32
      %86 = vector.broadcast %cst_47 : f32 to vector<64x1xf32>
      %87 = arith.subf %86, %85 : vector<64x1xf32>
      %c0_48 = arith.constant 0 : index
      %c0_49 = arith.constant 0 : index
      %88 = vector.load %arg4[%c0_48, %c0_49] : memref<1x128xf32, #tpu.memory_space<vmem>>, vector<1x128xf32>
      %89 = vector.broadcast %87 : vector<64x1xf32> to vector<64x128xf32>
      %90 = vector.broadcast %88 : vector<1x128xf32> to vector<64x128xf32>
      %91 = arith.mulf %89, %90 : vector<64x128xf32>
      %92 = arith.addf %83, %91 : vector<64x128xf32>
      %c0_50 = arith.constant 0 : index
      %c0_51 = arith.constant 0 : index
      %93 = vector.load %arg15[%c0_50, %c0_51] : memref<64x128xf32, #tpu.memory_space<vmem>>, vector<64x128xf32>
      tpu.vector_store %arg15[%c0_50, %c0_51], %92 {strides = array<i32>} : memref<64x128xf32, #tpu.memory_space<vmem>>, vector<64x128xf32>,
    } else {
    }
    return
  }
  func.func @transform_0(%arg0: i32, %arg1: i32) -> (i32, i32) {
    %c0_i32 = arith.constant 0 : i32
    %c0_i32_0 = arith.constant 0 : i32
    return %arg1, %c0_i32 : i32, i32
  }
  func.func @transform_1(%arg0: i32, %arg1: i32) -> (i32, i32) {
    %c0_i32 = arith.constant 0 : i32
    %c0_i32_0 = arith.constant 0 : i32
    return %c0_i32, %arg1 : i32, i32
  }
  func.func @transform_2(%arg0: i32, %arg1: i32) -> (i32, i32) {
    %c0_i32 = arith.constant 0 : i32
    %c0_i32_0 = arith.constant 0 : i32
    %c0_i32_1 = arith.constant 0 : i32
    return %c0_i32, %c0_i32_0 : i32, i32
  }
  func.func @transform_3(%arg0: i32, %arg1: i32) -> (i32, i32) {
    %c0_i32 = arith.constant 0 : i32
    %c0_i32_0 = arith.constant 0 : i32
    %c0_i32_1 = arith.constant 0 : i32
    return %c0_i32, %c0_i32_0 : i32, i32
  }
  func.func @transform_4(%arg0: i32, %arg1: i32) -> (i32, i32) {
    %c0_i32 = arith.constant 0 : i32
    %c0_i32_0 = arith.constant 0 : i32
    %c0_i32_1 = arith.constant 0 : i32
    return %c0_i32, %c0_i32_0 : i32, i32
  }
  func.func @transform_5(%arg0: i32, %arg1: i32) -> (i32, i32) {
    %c0_i32 = arith.constant 0 : i32
    %c0_i32_0 = arith.constant 0 : i32
    %c0_i32_1 = arith.constant 0 : i32
    return %c0_i32, %c0_i32_0 : i32, i32
  }
  func.func @transform_6(%arg0: i32, %arg1: i32) -> (i32, i32) {
    %c0_i32 = arith.constant 0 : i32
    %c0_i32_0 = arith.constant 0 : i32
    %c0_i32_1 = arith.constant 0 : i32
    return %c0_i32, %c0_i32_0 : i32, i32
  }
  func.func @transform_7(%arg0: i32, %arg1: i32) -> (i32, i32) {
    %c0_i32 = arith.constant 0 : i32
    %c0_i32_0 = arith.constant 0 : i32
    %c0_i32_1 = arith.constant 0 : i32
    return %c0_i32, %c0_i32_0 : i32, i32
  }
  func.func @transform_8(%arg0: i32, %arg1: i32) -> (i32, i32) {
    %c0_i32 = arith.constant 0 : i32
    %c0_i32_0 = arith.constant 0 : i32
    %c0_i32_1 = arith.constant 0 : i32
    return %c0_i32, %c0_i32_0 : i32, i32
  }
  func.func @transform_9(%arg0: i32, %arg1: i32) -> (i32, i32) {
    %c0_i32 = arith.constant 0 : i32
    %c0_i32_0 = arith.constant 0 : i32
    %c0_i32_1 = arith.constant 0 : i32
    return %c0_i32, %c0_i32_0 : i32, i32
  }
  func.func @transform_10(%arg0: i32, %arg1: i32) -> (i32, i32) {
    %c0_i32 = arith.constant 0 : i32
    %c0_i32_0 = arith.constant 0 : i32
    %c0_i32_1 = arith.constant 0 : i32
    return %c0_i32, %c0_i32_0 : i32, i32
  }
  func.func @transform_11(%arg0: i32, %arg1: i32) -> (i32, i32) {
    %c0_i32 = arith.constant 0 : i32
    %c0_i32_0 = arith.constant 0 : i32
    %c0_i32_1 = arith.constant 0 : i32
    return %c0_i32, %c0_i32_0 : i32, i32
  }
  func.func @transform_12(%arg0: i32, %arg1: i32) -> (i32, i32) {
    %c0_i32 = arith.constant 0 : i32
    %c0_i32_0 = arith.constant 0 : i32
    %c0_i32_1 = arith.constant 0 : i32
    return %c0_i32, %c0_i32_0 : i32, i32
  }
  func.func @transform_13(%arg0: i32, %arg1: i32) -> (i32, i32) {
    %c0_i32 = arith.constant 0 : i32
    %c0_i32_0 = arith.constant 0 : i32
    return %arg1, %c0_i32 : i32, i32
  }
}

</mosaic_0001>

<llo_original>
// kernel: tpu_custom_call.1
$region0: #{tpu_custom_call.1}
  #allocation0 [shape = 'u32[]', space=smem, size = 0x4, offset = 0x4, fixed_abs, tag = 'smem constant byte address 0x4 - core index']
  #allocation1 [shape = 'u32[72,128]{1,0:T(1,128)}', space=vmem, size = 0x9000, scoped, tag = 'internal scratch']
  #allocation2 [shape = 'f32[1,128]{1,0:T(1,128)}', space=vmem, size = 0x200, scoped, tag = 'scratch operand']
  #allocation3 [shape = 'f32[1,128]{1,0:T(1,128)}', space=vmem, size = 0x200, scoped, tag = 'scratch operand']
  #allocation4 [shape = 'f32[1,128]{1,0:T(1,128)}', space=vmem, size = 0x200, scoped, tag = 'scratch operand']
  #allocation5 [shape = 'f32[1,128]{1,0:T(1,128)}', space=vmem, size = 0x200, scoped, tag = 'scratch operand']
  %s0 = inlined_call_operand.hbm [shape: f32[64,128], index: 0, kind: input, shape index: {}]
  %s1 = inlined_call_operand.hbm [shape: f32[1,64], index: 1, kind: input, shape index: {}]
  %s2 = inlined_call_operand.vmem [shape: f32[1,128], index: 2, kind: input, shape index: {}]
  %s3 = inlined_call_operand.hbm [shape: bf16[128,128], index: 3, kind: input, shape index: {}]
  %s4 = inlined_call_operand.hbm [shape: f32[1,128], index: 4, kind: input, shape index: {}]
  %s5 = inlined_call_operand.vmem [shape: f32[1,128], index: 5, kind: input, shape index: {}]
  %s6 = inlined_call_operand.vmem [shape: f32[1,128], index: 6, kind: input, shape index: {}]
  %s7 = inlined_call_operand.hbm [shape: bf16[128,128], index: 7, kind: input, shape index: {}]
  %s8 = inlined_call_operand.vmem [shape: f32[1,128], index: 8, kind: input, shape index: {}]
  %s9 = inlined_call_operand.vmem [shape: f32[1,128], index: 9, kind: input, shape index: {}]
  %s10 = inlined_call_operand.vmem [shape: f32[1,128], index: 10, kind: input, shape index: {}]
  %s11 = inlined_call_operand.hbm [shape: bf16[128,256], index: 11, kind: input, shape index: {}]
  %s12 = inlined_call_operand.vmem [shape: f32[1,256], index: 12, kind: input, shape index: {}]
  %s13 = inlined_call_operand.hbm [shape: f32[64,128], index: 13, kind: output, shape index: {}]
  %s14 = sld [smem:[#allocation0]]
  $region125: #{tpu_custom_call.1} parent=0
    _
  %s16 = ssub.s32 1, %s14
  %s17 = scalar_select 0, %s16, %s14
  $region1: #{tpu_custom_call.1} parent=0
    #allocation6 [shape = 'u8[32768]{0}', space=vmem, size = 0x8000, scoped, tag = 'input window, operand 0, single buffered']
    #allocation7 [shape = 's32[2]{0}', space=sflag, size = 0x8, scoped, tag = 'scoped memory for tpu_custom_call.1']
    #allocation8 [shape = 's32[2]{0}', space=sflag, size = 0x8, scoped, tag = 'scoped memory for tpu_custom_call.1']
    #allocation9 [shape = 'u8[512]{0}', space=vmem, size = 0x400, scoped, tag = 'input window, operand 1, single buffered']
    #allocation10 [shape = 's32[1]{0}', space=sflag, size = 0x4, scoped, tag = 'scoped memory for tpu_custom_call.1']
    #allocation11 [shape = 'u8[32768]{0}', space=vmem, size = 0x8000, scoped, tag = 'input window, operand 3, single buffered']
    #allocation12 [shape = 'u8[512]{0}', space=vmem, size = 0x400, scoped, tag = 'input window, operand 4, single buffered']
    #allocation13 [shape = 's32[1]{0}', space=sflag, size = 0x4, scoped, tag = 'scoped memory for tpu_custom_call.1']
    #allocation14 [shape = 'u8[32768]{0}', space=vmem, size = 0x8000, scoped, tag = 'input window, operand 7, single buffered']
    #allocation15 [shape = 'u8[65536]{0}', space=vmem, size = 0x10000, scoped, tag = 'input window, operand 11, single buffered']
    #allocation16 [shape = 's32[1]{0}', space=sflag, size = 0x4, scoped, tag = 'scoped memory for tpu_custom_call.1']
    #allocation17 [shape = 'u8[32768]{0}', space=vmem, size = 0x8000, scoped, tag = 'output window, operand 0, single buffered']
    %18 = vsyncpa [#allocation7], 0
    %19 = vsyncpa [#allocation10], 0
    %20 = vsyncpa [#allocation13], 0
    %21 = vsyncpa [#allocation16], 0
    %22 = vsyncpa [#allocation8], 0
    loop: start=0, step=1, limit=5
    $region2: #{tpu_custom_call.1} parent=1 // loop_pre_header
      _
    $region3: #{tpu_custom_call.1} parent=1 // loop_header
      %s24 = sphi 0, %s28
      %p25 = scmp.ge.s32.totalorder %s24, 5
      %s31 = sphi 0, %s43
      %s32 = sphi 0, %s39
      %s33 = sphi 0, %s31
      %s34 = sphi 0, %s32
      %s35 = sphi 0, %s33
      %s36 = sphi 0, %s34
      %s46 = sphi 0, %s48
      %s49 = sphi 0, %s46
      %s50 = sphi 0, %s49
      %s66 = sphi 0, %s50
      %s72 = sphi 0, %s74
      %s75 = sphi 0, %s72
      %s76 = sphi 0, %s75
      %s92 = sphi 0, %s76
      %s96 = sphi 0, %s96
      %s98 = sphi 0, %s96
      %s99 = sphi 0, %s98
      %s113 = sphi 0, %s99
      %s117 = sphi 0, %s117
      %s119 = sphi 0, %s117
      %s120 = sphi 0, %s119
      %s134 = sphi 0, %s120
      %s138 = sphi 0, %s138
      %s140 = sphi 0, %s138
      %s141 = sphi 0, %s140
      %s155 = sphi 0, %s141
      %s159 = sphi 0, %s159
      %s161 = sphi 0, %s159
      %s162 = sphi 0, %s161
      %s176 = sphi 0, %s162
      %s180 = sphi 0, %s180
      %s182 = sphi 0, %s180
      %s183 = sphi 0, %s182
      %s197 = sphi 0, %s183
      %s201 = sphi 0, %s201
      %s203 = sphi 0, %s201
      %s204 = sphi 0, %s203
      %s218 = sphi 0, %s204
      %s222 = sphi 0, %s222
      %s224 = sphi 0, %s222
      %s225 = sphi 0, %s224
      %s239 = sphi 0, %s225
      %s243 = sphi 0, %s243
      %s245 = sphi 0, %s243
      %s246 = sphi 0, %s245
      %s260 = sphi 0, %s246
      %s264 = sphi 0, %s264
      %s266 = sphi 0, %s264
      %s267 = sphi 0, %s266
      %s281 = sphi 0, %s267
      %s285 = sphi 0, %s285
      %s287 = sphi 0, %s285
      %s288 = sphi 0, %s287
      %s302 = sphi 0, %s288
      %s306 = sphi 0, %s306
      %s308 = sphi 0, %s306
      %s309 = sphi 0, %s308
      %s323 = sphi 0, %s309
      %s329 = sphi 0, %s331
      %s332 = sphi 0, %s329
      %s333 = sphi 0, %s332
      %s349 = sphi 0, %s333
    $region4: #{tpu_custom_call.1} parent=1 // loop_header_branch
      %27 = sbr.rel (%p25) target = $region8
    $region5: #{tpu_custom_call.1} parent=1 // loop_body
      %s29 = ssub.s32 %s24, 1
      %s30 = ssub.s32 %s24, 2
      %s37 = sadd.s32 1, %s32
      %p38 = scmp.ge.s32.totalorder %s37, 1
      %s39 = scalar_select %p38, 0, %s37
      %s40 = sadd.s32 1, %s31
      %s41 = scalar_select %p38, %s40, %s31
      %p42 = scmp.ge.s32.totalorder %s41, 3
      %s43 = scalar_select %p42, 0, %s41
      %s44 = ssub.s32 %s32, %s39
      %p45 = scmp.eq.s32.totalorder %s44, 0
      %s47 = sadd.s32 %s46, 1
      %s48 = scalar_select %p45, %s46, %s47
      %p51 = pneg %p45
      %p52 = scmp.eq.s32.totalorder %s24, 2
      %p53 = por %p51, %p52
      %p54 = scmp.ne.s32.totalorder %s46, %s49
      %p55 = scmp.eq.s32.totalorder %s24, 0
      %p56 = por %p54, %p55
      %p57 = scmp.ne.s32.totalorder %s46, %s49
      %p58 = scmp.eq.s32.totalorder %s29, 2
      %p59 = por %p57, %p58
      %p60 = scmp.ne.s32.totalorder %s49, %s50
      %p61 = scmp.eq.s32.totalorder %s29, 0
      %p62 = por %p60, %p61
      %p63 = scmp.ne.s32.totalorder %s49, %s50
      %p64 = scmp.eq.s32.totalorder %s30, 2
      %p65 = por %p63, %p64
      %p67 = scmp.ne.s32.totalorder %s50, %s66
      %p68 = scmp.eq.s32.totalorder %s30, 0
      %p69 = por %p67, %p68
      %s70 = ssub.s32 %s32, %s39
      %p71 = scmp.eq.s32.totalorder %s70, 0
      %s73 = sadd.s32 %s72, 1
      %s74 = scalar_select %p71, %s72, %s73
      %p77 = pneg %p71
      %p78 = scmp.eq.s32.totalorder %s24, 2
      %p79 = por %p77, %p78
      %p80 = scmp.ne.s32.totalorder %s72, %s75
      %p81 = scmp.eq.s32.totalorder %s24, 0
      %p82 = por %p80, %p81
      %p83 = scmp.ne.s32.totalorder %s72, %s75
      %p84 = scmp.eq.s32.totalorder %s29, 2
      %p85 = por %p83, %p84
      %p86 = scmp.ne.s32.totalorder %s75, %s76
      %p87 = scmp.eq.s32.totalorder %s29, 0
      %p88 = por %p86, %p87
      %p89 = scmp.ne.s32.totalorder %s75, %s76
      %p90 = scmp.eq.s32.totalorder %s30, 2
      %p91 = por %p89, %p90
      %p93 = scmp.ne.s32.totalorder %s76, %s92
      %p94 = scmp.eq.s32.totalorder %s30, 0
      %p95 = por %p93, %p94
      %s97 = sadd.s32 %s96, 1
      %p100 = scmp.eq.s32.totalorder %s24, 2
      %p101 = scmp.ne.s32.totalorder %s96, %s98
      %p102 = scmp.eq.s32.totalorder %s24, 0
      %p103 = por %p101, %p102
      %p104 = scmp.ne.s32.totalorder %s96, %s98
      %p105 = scmp.eq.s32.totalorder %s29, 2
      %p106 = por %p104, %p105
      %p107 = scmp.ne.s32.totalorder %s98, %s99
      %p108 = scmp.eq.s32.totalorder %s29, 0
      %p109 = por %p107, %p108
      %p110 = scmp.ne.s32.totalorder %s98, %s99
      %p111 = scmp.eq.s32.totalorder %s30, 2
      %p112 = por %p110, %p111
      %p114 = scmp.ne.s32.totalorder %s99, %s113
      %p115 = scmp.eq.s32.totalorder %s30, 0
      %p116 = por %p114, %p115
      %s118 = sadd.s32 %s117, 1
      %p121 = scmp.eq.s32.totalorder %s24, 2
      %p122 = scmp.ne.s32.totalorder %s117, %s119
      %p123 = scmp.eq.s32.totalorder %s24, 0
      %p124 = por %p122, %p123
      %p125 = scmp.ne.s32.totalorder %s117, %s119
      %p126 = scmp.eq.s32.totalorder %s29, 2
      %p127 = por %p125, %p126
      %p128 = scmp.ne.s32.totalorder %s119, %s120
      %p129 = scmp.eq.s32.totalorder %s29, 0
      %p130 = por %p128, %p129
      %p131 = scmp.ne.s32.totalorder %s119, %s120
      %p132 = scmp.eq.s32.totalorder %s30, 2
      %p133 = por %p131, %p132
      %p135 = scmp.ne.s32.totalorder %s120, %s134
      %p136 = scmp.eq.s32.totalorder %s30, 0
      %p137 = por %p135, %p136
      %s139 = sadd.s32 %s138, 1
      %p142 = scmp.eq.s32.totalorder %s24, 2
      %p143 = scmp.ne.s32.totalorder %s138, %s140
      %p144 = scmp.eq.s32.totalorder %s24, 0
      %p145 = por %p143, %p144
      %p146 = scmp.ne.s32.totalorder %s138, %s140
      %p147 = scmp.eq.s32.totalorder %s29, 2
      %p148 = por %p146, %p147
      %p149 = scmp.ne.s32.totalorder %s140, %s141
      %p150 = scmp.eq.s32.totalorder %s29, 0
      %p151 = por %p149, %p150
      %p152 = scmp.ne.s32.totalorder %s140, %s141
      %p153 = scmp.eq.s32.totalorder %s30, 2
      %p154 = por %p152, %p153
      %p156 = scmp.ne.s32.totalorder %s141, %s155
      %p157 = scmp.eq.s32.totalorder %s30, 0
      %p158 = por %p156, %p157
      %s160 = sadd.s32 %s159, 1
      %p163 = scmp.eq.s32.totalorder %s24, 2
      %p164 = scmp.ne.s32.totalorder %s159, %s161
      %p165 = scmp.eq.s32.totalorder %s24, 0
      %p166 = por %p164, %p165
      %p167 = scmp.ne.s32.totalorder %s159, %s161
      %p168 = scmp.eq.s32.totalorder %s29, 2
      %p169 = por %p167, %p168
      %p170 = scmp.ne.s32.totalorder %s161, %s162
      %p171 = scmp.eq.s32.totalorder %s29, 0
      %p172 = por %p170, %p171
      %p173 = scmp.ne.s32.totalorder %s161, %s162
      %p174 = scmp.eq.s32.totalorder %s30, 2
      %p175 = por %p173, %p174
      %p177 = scmp.ne.s32.totalorder %s162, %s176
      %p178 = scmp.eq.s32.totalorder %s30, 0
      %p179 = por %p177, %p178
      %s181 = sadd.s32 %s180, 1
      %p184 = scmp.eq.s32.totalorder %s24, 2
      %p185 = scmp.ne.s32.totalorder %s180, %s182
      %p186 = scmp.eq.s32.totalorder %s24, 0
      %p187 = por %p185, %p186
      %p188 = scmp.ne.s32.totalorder %s180, %s182
      %p189 = scmp.eq.s32.totalorder %s29, 2
      %p190 = por %p188, %p189
      %p191 = scmp.ne.s32.totalorder %s182, %s183
      %p192 = scmp.eq.s32.totalorder %s29, 0
      %p193 = por %p191, %p192
      %p194 = scmp.ne.s32.totalorder %s182, %s183
      %p195 = scmp.eq.s32.totalorder %s30, 2
      %p196 = por %p194, %p195
      %p198 = scmp.ne.s32.totalorder %s183, %s197
      %p199 = scmp.eq.s32.totalorder %s30, 0
      %p200 = por %p198, %p199
      %s202 = sadd.s32 %s201, 1
      %p205 = scmp.eq.s32.totalorder %s24, 2
      %p206 = scmp.ne.s32.totalorder %s201, %s203
      %p207 = scmp.eq.s32.totalorder %s24, 0
      %p208 = por %p206, %p207
      %p209 = scmp.ne.s32.totalorder %s201, %s203
      %p210 = scmp.eq.s32.totalorder %s29, 2
      %p211 = por %p209, %p210
      %p212 = scmp.ne.s32.totalorder %s203, %s204
      %p213 = scmp.eq.s32.totalorder %s29, 0
      %p214 = por %p212, %p213
      %p215 = scmp.ne.s32.totalorder %s203, %s204
      %p216 = scmp.eq.s32.totalorder %s30, 2
      %p217 = por %p215, %p216
      %p219 = scmp.ne.s32.totalorder %s204, %s218
      %p220 = scmp.eq.s32.totalorder %s30, 0
      %p221 = por %p219, %p220
      %s223 = sadd.s32 %s222, 1
      %p226 = scmp.eq.s32.totalorder %s24, 2
      %p227 = scmp.ne.s32.totalorder %s222, %s224
      %p228 = scmp.eq.s32.totalorder %s24, 0
      %p229 = por %p227, %p228
      %p230 = scmp.ne.s32.totalorder %s222, %s224
      %p231 = scmp.eq.s32.totalorder %s29, 2
      %p232 = por %p230, %p231
      %p233 = scmp.ne.s32.totalorder %s224, %s225
      %p234 = scmp.eq.s32.totalorder %s29, 0
      %p235 = por %p233, %p234
      %p236 = scmp.ne.s32.totalorder %s224, %s225
      %p237 = scmp.eq.s32.totalorder %s30, 2
      %p238 = por %p236, %p237
      %p240 = scmp.ne.s32.totalorder %s225, %s239
      %p241 = scmp.eq.s32.totalorder %s30, 0
      %p242 = por %p240, %p241
      %s244 = sadd.s32 %s243, 1
      %p247 = scmp.eq.s32.totalorder %s24, 2
      %p248 = scmp.ne.s32.totalorder %s243, %s245
      %p249 = scmp.eq.s32.totalorder %s24, 0
      %p250 = por %p248, %p249
      %p251 = scmp.ne.s32.totalorder %s243, %s245
      %p252 = scmp.eq.s32.totalorder %s29, 2
      %p253 = por %p251, %p252
      %p254 = scmp.ne.s32.totalorder %s245, %s246
      %p255 = scmp.eq.s32.totalorder %s29, 0
      %p256 = por %p254, %p255
      %p257 = scmp.ne.s32.totalorder %s245, %s246
      %p258 = scmp.eq.s32.totalorder %s30, 2
      %p259 = por %p257, %p258
      %p261 = scmp.ne.s32.totalorder %s246, %s260
      %p262 = scmp.eq.s32.totalorder %s30, 0
      %p263 = por %p261, %p262
      %s265 = sadd.s32 %s264, 1
      %p268 = scmp.eq.s32.totalorder %s24, 2
      %p269 = scmp.ne.s32.totalorder %s264, %s266
      %p270 = scmp.eq.s32.totalorder %s24, 0
      %p271 = por %p269, %p270
      %p272 = scmp.ne.s32.totalorder %s264, %s266
      %p273 = scmp.eq.s32.totalorder %s29, 2
      %p274 = por %p272, %p273
      %p275 = scmp.ne.s32.totalorder %s266, %s267
      %p276 = scmp.eq.s32.totalorder %s29, 0
      %p277 = por %p275, %p276
      %p278 = scmp.ne.s32.totalorder %s266, %s267
      %p279 = scmp.eq.s32.totalorder %s30, 2
      %p280 = por %p278, %p279
      %p282 = scmp.ne.s32.totalorder %s267, %s281
      %p283 = scmp.eq.s32.totalorder %s30, 0
      %p284 = por %p282, %p283
      %s286 = sadd.s32 %s285, 1
      %p289 = scmp.eq.s32.totalorder %s24, 2
      %p290 = scmp.ne.s32.totalorder %s285, %s287
      %p291 = scmp.eq.s32.totalorder %s24, 0
      %p292 = por %p290, %p291
      %p293 = scmp.ne.s32.totalorder %s285, %s287
      %p294 = scmp.eq.s32.totalorder %s29, 2
      %p295 = por %p293, %p294
      %p296 = scmp.ne.s32.totalorder %s287, %s288
      %p297 = scmp.eq.s32.totalorder %s29, 0
      %p298 = por %p296, %p297
      %p299 = scmp.ne.s32.totalorder %s287, %s288
      %p300 = scmp.eq.s32.totalorder %s30, 2
      %p301 = por %p299, %p300
      %p303 = scmp.ne.s32.totalorder %s288, %s302
      %p304 = scmp.eq.s32.totalorder %s30, 0
      %p305 = por %p303, %p304
      %s307 = sadd.s32 %s306, 1
      %p310 = scmp.eq.s32.totalorder %s24, 2
      %p311 = scmp.ne.s32.totalorder %s306, %s308
      %p312 = scmp.eq.s32.totalorder %s24, 0
      %p313 = por %p311, %p312
      %p314 = scmp.ne.s32.totalorder %s306, %s308
      %p315 = scmp.eq.s32.totalorder %s29, 2
      %p316 = por %p314, %p315
      %p317 = scmp.ne.s32.totalorder %s308, %s309
      %p318 = scmp.eq.s32.totalorder %s29, 0
      %p319 = por %p317, %p318
      %p320 = scmp.ne.s32.totalorder %s308, %s309
      %p321 = scmp.eq.s32.totalorder %s30, 2
      %p322 = por %p320, %p321
      %p324 = scmp.ne.s32.totalorder %s309, %s323
      %p325 = scmp.eq.s32.totalorder %s30, 0
      %p326 = por %p324, %p325
      %s327 = ssub.s32 %s32, %s39
      %p328 = scmp.eq.s32.totalorder %s327, 0
      %s330 = sadd.s32 %s329, 1
      %s331 = scalar_select %p328, %s329, %s330
      %p334 = pneg %p328
      %p335 = scmp.eq.s32.totalorder %s24, 2
      %p336 = por %p334, %p335
      %p337 = scmp.ne.s32.totalorder %s329, %s332
      %p338 = scmp.eq.s32.totalorder %s24, 0
      %p339 = por %p337, %p338
      %p340 = scmp.ne.s32.totalorder %s329, %s332
      %p341 = scmp.eq.s32.totalorder %s29, 2
      %p342 = por %p340, %p341
      %p343 = scmp.ne.s32.totalorder %s332, %s333
      %p344 = scmp.eq.s32.totalorder %s29, 0
      %p345 = por %p343, %p344
      %p346 = scmp.ne.s32.totalorder %s332, %s333
      %p347 = scmp.eq.s32.totalorder %s30, 2
      %p348 = por %p346, %p347
      %p350 = scmp.ne.s32.totalorder %s333, %s349
      %p351 = scmp.eq.s32.totalorder %s30, 0
      %p352 = por %p350, %p351
      %p353 = scmp.le.s32.totalorder 1, %s24
      %p354 = scmp.lt.s32.totalorder %s24, 4
      %p355 = pnand %p353, %p354
      %p356 = pneg %p355
      // Predicated region
      $region9: #{tpu_custom_call.1} parent=5 // pred_check
        _
      $region10: #{tpu_custom_call.1} parent=5 // pred_check_branch
        %358 = sbr.rel (%p355) target = $region12
      $region11: #{tpu_custom_call.1} parent=5 // pred_region
        %s359 = ssub.s32 %s24, 1
        // Predicated region
        $region13: #{tpu_custom_call.1} parent=11 // pred_check
          %p360 = pneg %p62
        $region14: #{tpu_custom_call.1} parent=11 // pred_check_branch
          %362 = sbr.rel (%p360) target = $region16
        $region15: #{tpu_custom_call.1} parent=11 // pred_region
          %s363 = smul.u32 8, %s34
          %365 = vsyncadd [#allocation7], 0
          %s366 = smul.addr %s363, 8
          %s367 = scalar_lea.hbm %s0, %s366
          %s368 = sshll.u32 %s367, 4
          %s369 = int_to_ptr.hbm [resolvable:$true] %s368
          %s370 = sshll.u32 [#allocation6], 4
          %s371 = int_to_ptr.vmem [resolvable:$true] %s370
          %376 = dma.hbm_to_vmem [thread:$0]  %s369, 1024, %s371, [#allocation7], 128, 128, 8
        $region16: #{tpu_custom_call.1} parent=11 // pred_fallthru
          _
        // Predicated region
        $region17: #{tpu_custom_call.1} parent=11 // pred_check
          %p377 = pneg %p88
        $region18: #{tpu_custom_call.1} parent=11 // pred_check_branch
          %379 = sbr.rel (%p377) target = $region20
        $region19: #{tpu_custom_call.1} parent=11 // pred_region
          %381 = vsyncadd [#allocation10], 0
          %s382 = scalar_lea.hbm %s1, %s34
          %s384 = sshll.u32 %s382, 4
          %s385 = int_to_ptr.hbm [resolvable:$true] %s384
          %s386 = sshll.u32 [#allocation9], 4
          %s387 = int_to_ptr.vmem [resolvable:$true] %s386
          %389 = dma.hbm_to_vmem [thread:$0]  %s385, 16, %s387, [#allocation10]
        $region20: #{tpu_custom_call.1} parent=11 // pred_fallthru
          _
        // Predicated region
        $region21: #{tpu_custom_call.1} parent=11 // pred_check
          %p390 = pneg %p109
        $region22: #{tpu_custom_call.1} parent=11 // pred_check_branch
          %392 = sbr.rel (%p390) target = $region24
        $region23: #{tpu_custom_call.1} parent=11 // pred_region
          _
        $region24: #{tpu_custom_call.1} parent=11 // pred_fallthru
          _
        // Predicated region
        $region25: #{tpu_custom_call.1} parent=11 // pred_check
          %p393 = pneg %p130
        $region26: #{tpu_custom_call.1} parent=11 // pred_check_branch
          %395 = sbr.rel (%p393) target = $region28
        $region27: #{tpu_custom_call.1} parent=11 // pred_region
          %397 = vsyncadd [#allocation10], 0
          %s398 = sshll.u32 %s3, 4
          %s399 = int_to_ptr.hbm [resolvable:$true] %s398
          %s400 = sshll.u32 [#allocation11], 4
          %s401 = int_to_ptr.vmem [resolvable:$true] %s400
          %406 = dma.hbm_to_vmem [thread:$0]  %s399, 1024, %s401, [#allocation10], 64, 64, 4
        $region28: #{tpu_custom_call.1} parent=11 // pred_fallthru
          _
        // Predicated region
        $region29: #{tpu_custom_call.1} parent=11 // pred_check
          %p407 = pneg %p151
        $region30: #{tpu_custom_call.1} parent=11 // pred_check_branch
          %409 = sbr.rel (%p407) target = $region32
        $region31: #{tpu_custom_call.1} parent=11 // pred_region
          %411 = vsyncadd [#allocation13], 0
          %s413 = sshll.u32 %s4, 4
          %s414 = int_to_ptr.hbm [resolvable:$true] %s413
          %s415 = sshll.u32 [#allocation12], 4
          %s416 = int_to_ptr.vmem [resolvable:$true] %s415
          %418 = dma.hbm_to_vmem [thread:$0]  %s414, 16, %s416, [#allocation13]
        $region32: #{tpu_custom_call.1} parent=11 // pred_fallthru
          _
        // Predicated region
        $region33: #{tpu_custom_call.1} parent=11 // pred_check
          %p419 = pneg %p172
        $region34: #{tpu_custom_call.1} parent=11 // pred_check_branch
          %421 = sbr.rel (%p419) target = $region36
        $region35: #{tpu_custom_call.1} parent=11 // pred_region
          _
        $region36: #{tpu_custom_call.1} parent=11 // pred_fallthru
          _
        // Predicated region
        $region37: #{tpu_custom_call.1} parent=11 // pred_check
          %p422 = pneg %p193
        $region38: #{tpu_custom_call.1} parent=11 // pred_check_branch
          %424 = sbr.rel (%p422) target = $region40
        $region39: #{tpu_custom_call.1} parent=11 // pred_region
          _
        $region40: #{tpu_custom_call.1} parent=11 // pred_fallthru
          _
        // Predicated region
        $region41: #{tpu_custom_call.1} parent=11 // pred_check
          %p425 = pneg %p214
        $region42: #{tpu_custom_call.1} parent=11 // pred_check_branch
          %427 = sbr.rel (%p425) target = $region44
        $region43: #{tpu_custom_call.1} parent=11 // pred_region
          %429 = vsyncadd [#allocation13], 0
          %s430 = sshll.u32 %s7, 4
          %s431 = int_to_ptr.hbm [resolvable:$true] %s430
          %s432 = sshll.u32 [#allocation14], 4
          %s433 = int_to_ptr.vmem [resolvable:$true] %s432
          %438 = dma.hbm_to_vmem [thread:$0]  %s431, 1024, %s433, [#allocation13], 64, 64, 4
        $region44: #{tpu_custom_call.1} parent=11 // pred_fallthru
          _
        // Predicated region
        $region45: #{tpu_custom_call.1} parent=11 // pred_check
          %p439 = pneg %p235
        $region46: #{tpu_custom_call.1} parent=11 // pred_check_branch
          %441 = sbr.rel (%p439) target = $region48
        $region47: #{tpu_custom_call.1} parent=11 // pred_region
          _
        $region48: #{tpu_custom_call.1} parent=11 // pred_fallthru
          _
        // Predicated region
        $region49: #{tpu_custom_call.1} parent=11 // pred_check
          %p442 = pneg %p256
        $region50: #{tpu_custom_call.1} parent=11 // pred_check_branch
          %444 = sbr.rel (%p442) target = $region52
        $region51: #{tpu_custom_call.1} parent=11 // pred_region
          _
        $region52: #{tpu_custom_call.1} parent=11 // pred_fallthru
          _
        // Predicated region
        $region53: #{tpu_custom_call.1} parent=11 // pred_check
          %p445 = pneg %p277
        $region54: #{tpu_custom_call.1} parent=11 // pred_check_branch
          %447 = sbr.rel (%p445) target = $region56
        $region55: #{tpu_custom_call.1} parent=11 // pred_region
          _
        $region56: #{tpu_custom_call.1} parent=11 // pred_fallthru
          _
        // Predicated region
        $region57: #{tpu_custom_call.1} parent=11 // pred_check
          %p448 = pneg %p298
        $region58: #{tpu_custom_call.1} parent=11 // pred_check_branch
          %450 = sbr.rel (%p448) target = $region60
        $region59: #{tpu_custom_call.1} parent=11 // pred_region
          %452 = vsyncadd [#allocation16], 0
          %s453 = sshll.u32 %s11, 4
          %s454 = int_to_ptr.hbm [resolvable:$true] %s453
          %s455 = sshll.u32 [#allocation15], 4
          %s456 = int_to_ptr.vmem [resolvable:$true] %s455
          %461 = dma.hbm_to_vmem [thread:$0]  %s454, 2048, %s456, [#allocation16], 128, 128, 8
        $region60: #{tpu_custom_call.1} parent=11 // pred_fallthru
          _
        // Predicated region
        $region61: #{tpu_custom_call.1} parent=11 // pred_check
          %p462 = pneg %p319
        $region62: #{tpu_custom_call.1} parent=11 // pred_check_branch
          %464 = sbr.rel (%p462) target = $region64
        $region63: #{tpu_custom_call.1} parent=11 // pred_region
          _
        $region64: #{tpu_custom_call.1} parent=11 // pred_fallthru
          _
      $region12: #{tpu_custom_call.1} parent=5 // pred_fallthru
        _
      %p465 = scmp.lt.s32.totalorder %s24, 3
      // Predicated region
      $region65: #{tpu_custom_call.1} parent=5 // pred_check
        %p466 = pneg %p465
      $region66: #{tpu_custom_call.1} parent=5 // pred_check_branch
        %468 = sbr.rel (%p466) target = $region68
      $region67: #{tpu_custom_call.1} parent=5 // pred_region
        _
      $region68: #{tpu_custom_call.1} parent=5 // pred_fallthru
        _
      %p469 = scmp.le.s32.totalorder 1, %s24
      %p470 = scmp.lt.s32.totalorder %s24, 4
      %p471 = pnand %p469, %p470
      %p472 = pneg %p471
      // Predicated region
      $region69: #{tpu_custom_call.1} parent=5 // pred_check
        _
      $region70: #{tpu_custom_call.1} parent=5 // pred_check_branch
        %474 = sbr.rel (%p471) target = $region72
      $region71: #{tpu_custom_call.1} parent=5 // pred_region
        %s475 = ssub.s32 %s24, 1
        // Predicated region
        $region73: #{tpu_custom_call.1} parent=71 // pred_check
          %p476 = pneg %p62
        $region74: #{tpu_custom_call.1} parent=71 // pred_check_branch
          %478 = sbr.rel (%p476) target = $region76
        $region75: #{tpu_custom_call.1} parent=71 // pred_region
          %480 = dma.done [#allocation7], 1024
        $region76: #{tpu_custom_call.1} parent=71 // pred_fallthru
          _
        // Predicated region
        $region77: #{tpu_custom_call.1} parent=71 // pred_check
          %p481 = pneg %p88
        $region78: #{tpu_custom_call.1} parent=71 // pred_check_branch
          %483 = sbr.rel (%p481) target = $region80
        $region79: #{tpu_custom_call.1} parent=71 // pred_region
          %485 = dma.done [#allocation10], 16
        $region80: #{tpu_custom_call.1} parent=71 // pred_fallthru
          _
        // Predicated region
        $region81: #{tpu_custom_call.1} parent=71 // pred_check
          %p486 = pneg %p130
        $region82: #{tpu_custom_call.1} parent=71 // pred_check_branch
          %488 = sbr.rel (%p486) target = $region84
        $region83: #{tpu_custom_call.1} parent=71 // pred_region
          %490 = dma.done [#allocation10], 1024
        $region84: #{tpu_custom_call.1} parent=71 // pred_fallthru
          _
        // Predicated region
        $region85: #{tpu_custom_call.1} parent=71 // pred_check
          %p491 = pneg %p151
        $region86: #{tpu_custom_call.1} parent=71 // pred_check_branch
          %493 = sbr.rel (%p491) target = $region88
        $region87: #{tpu_custom_call.1} parent=71 // pred_region
          %495 = dma.done [#allocation13], 16
        $region88: #{tpu_custom_call.1} parent=71 // pred_fallthru
          _
        // Predicated region
        $region89: #{tpu_custom_call.1} parent=71 // pred_check
          %p496 = pneg %p214
        $region90: #{tpu_custom_call.1} parent=71 // pred_check_branch
          %498 = sbr.rel (%p496) target = $region92
        $region91: #{tpu_custom_call.1} parent=71 // pred_region
          %500 = dma.done [#allocation13], 1024
        $region92: #{tpu_custom_call.1} parent=71 // pred_fallthru
          _
        // Predicated region
        $region93: #{tpu_custom_call.1} parent=71 // pred_check
          %p501 = pneg %p298
        $region94: #{tpu_custom_call.1} parent=71 // pred_check_branch
          %503 = sbr.rel (%p501) target = $region96
        $region95: #{tpu_custom_call.1} parent=71 // pred_region
          %505 = dma.done [#allocation16], 2048
        $region96: #{tpu_custom_call.1} parent=71 // pred_fallthru
          _
        %p506 = pneg %p62
        %p507 = pneg %p59
        %p508 = pneg %p88
        %p509 = pneg %p85
        %p510 = pneg %p109
        %p511 = pneg %p106
        %p512 = pneg %p130
        %p513 = pneg %p127
        %p514 = pneg %p151
        %p515 = pneg %p148
        %p516 = pneg %p172
        %p517 = pneg %p169
        %p518 = pneg %p193
        %p519 = pneg %p190
        %p520 = pneg %p214
        %p521 = pneg %p211
        %p522 = pneg %p235
        %p523 = pneg %p232
        %p524 = pneg %p256
        %p525 = pneg %p253
        %p526 = pneg %p277
        %p527 = pneg %p274
        %p528 = pneg %p298
        %p529 = pneg %p295
        %p530 = pneg %p319
        %p531 = pneg %p316
        %p532 = pneg %p345
        %p533 = pneg %p342
        %s534 = smul.u32 8, %s34
        %s535 = smul.u32 8, %s34
        %p536 = scmp.eq.s32.totalorder %s33, 0
        %p537 = scmp.eq.s32.totalorder %s34, 0
        %p538 = pnand %p536, %p537
        %p539 = pneg %p538
        // Predicated region
        $region97: #{tpu_custom_call.1} parent=71 // pred_check
          _
        $region98: #{tpu_custom_call.1} parent=71 // pred_check_branch
          %541 = sbr.rel (%p538) target = $region100
        $region99: #{tpu_custom_call.1} parent=71 // pred_region
          %542 = vst [vmem:[#allocation2] sm:$0x1] 0.0
          %543 = vst [vmem:[#allocation3] sm:$0x1] 0.0
          %544 = vst [vmem:[#allocation4] sm:$0x1] 0.0
          %545 = vst [vmem:[#allocation5] sm:$0x1] 0.0
        $region100: #{tpu_custom_call.1} parent=71 // pred_fallthru
          _
        %v546 = vld [vmem:[#allocation6] sm:$0xff]
        %v547 = vld [vmem:[#allocation6 + $0x8] sm:$0xff]
        %v548 = vld [vmem:[#allocation6 + $0x10] sm:$0xff]
        %v549 = vld [vmem:[#allocation6 + $0x18] sm:$0xff]
        %v550 = vld [vmem:[#allocation6 + $0x20] sm:$0xff]
        %v551 = vld [vmem:[#allocation6 + $0x28] sm:$0xff]
        %v552 = vld [vmem:[#allocation6 + $0x30] sm:$0xff]
        %v553 = vld [vmem:[#allocation6 + $0x38] sm:$0xff]
        %v554 = vpack.c.bf16 %v547, %v546
        %v555 = vpack.c.bf16 %v549, %v548
        %v556 = vpack.c.bf16 %v551, %v550
        %v557 = vpack.c.bf16 %v553, %v552
        %v558 = vld [vmem:[#allocation9] sm:$0x1]
        %v559 = vld [vmem:[#allocation11] sm:$0xf]
        %v560 = vld [vmem:[#allocation11 + $0x4] sm:$0xf]
        %v561 = vld [vmem:[#allocation11 + $0x8] sm:$0xf]
        %v562 = vld [vmem:[#allocation11 + $0xc] sm:$0xf]
        %v563 = vld [vmem:[#allocation11 + $0x10] sm:$0xf]
        %v564 = vld [vmem:[#allocation11 + $0x14] sm:$0xf]
        %v565 = vld [vmem:[#allocation11 + $0x18] sm:$0xf]
        %v566 = vld [vmem:[#allocation11 + $0x1c] sm:$0xf]
        %v567 = vld [vmem:[#allocation11 + $0x20] sm:$0xf]
        %v568 = vld [vmem:[#allocation11 + $0x24] sm:$0xf]
        %v569 = vld [vmem:[#allocation11 + $0x28] sm:$0xf]
        %v570 = vld [vmem:[#allocation11 + $0x2c] sm:$0xf]
        %v571 = vld [vmem:[#allocation11 + $0x30] sm:$0xf]
        %v572 = vld [vmem:[#allocation11 + $0x34] sm:$0xf]
        %v573 = vld [vmem:[#allocation11 + $0x38] sm:$0xf]
        %v574 = vld [vmem:[#allocation11 + $0x3c] sm:$0xf]
        %v575 = vld [vmem:[#allocation12] sm:$0x1]
        %v577 = vperm.slane %v575, 0
        %v595 = vunpack.c.l.b16 %v559
        %v596 = vunpack.c.l.b16 %v560
        %v597 = vunpack.c.l.b16 %v561
        %v598 = vunpack.c.l.b16 %v562
        %v599 = vunpack.c.l.b16 %v563
        %v600 = vunpack.c.l.b16 %v564
        %v601 = vunpack.c.l.b16 %v565
        %v602 = vunpack.c.l.b16 %v566
        %v603 = vunpack.c.l.b16 %v567
        %v604 = vunpack.c.l.b16 %v568
        %v605 = vunpack.c.l.b16 %v569
        %v606 = vunpack.c.l.b16 %v570
        %v607 = vunpack.c.l.b16 %v571
        %v608 = vunpack.c.l.b16 %v572
        %v609 = vunpack.c.l.b16 %v573
        %v610 = vunpack.c.l.b16 %v574
        %v611 = vpack.c.b16 %v596, %v595
        %v612 = vpack.c.b16 %v598, %v597
        %v613 = vpack.c.b16 %v600, %v599
        %v614 = vpack.c.b16 %v602, %v601
        %v615 = vpack.c.b16 %v604, %v603
        %v616 = vpack.c.b16 %v606, %v605
        %v617 = vpack.c.b16 %v608, %v607
        %v618 = vpack.c.b16 %v610, %v609
        %627 = vmatpush.bf16.msra.mxu0 %v618
        %628 = vmatpush.bf16.msra.mxu0 %v617
        %629 = vmatpush.bf16.msra.mxu0 %v616
        %630 = vmatpush.bf16.msra.mxu0 %v615
        %631 = vmatpush.bf16.msra.mxu0 %v614
        %632 = vmatpush.bf16.msra.mxu0 %v613
        %633 = vmatpush.bf16.msra.mxu0 %v612
        %634 = vmatpush.bf16.msra.mxu0 %v611
        %635 = vmatmul.bf16.gmra.mxu0 %v554
        %v636 = vpop.f32.mrf.mxu0
        %v637 = vadd.f32 %v577, %v636
        %v638 = vpop.f32.mrf.mxu0
        %v639 = vadd.f32 %v577, %v638
        %640 = vmatmul.bf16.gmra.mxu0 %v555
        %v641 = vpop.f32.mrf.mxu0
        %v642 = vadd.f32 %v577, %v641
        %v643 = vpop.f32.mrf.mxu0
        %v644 = vadd.f32 %v577, %v643
        %645 = vmatmul.bf16.gmra.mxu0 %v556
        %v646 = vpop.f32.mrf.mxu0
        %v647 = vadd.f32 %v577, %v646
        %v648 = vpop.f32.mrf.mxu0
        %v649 = vadd.f32 %v577, %v648
        %650 = vmatmul.bf16.gmra.mxu0 %v557
        %v651 = vpop.f32.mrf.mxu0
        %v652 = vadd.f32 %v577, %v651
        %v653 = vpop.f32.mrf.mxu0
        %v654 = vadd.f32 %v577, %v653
        %655 = vdwg.mxu0
        %v656 = vmul.f32 %v637, 0.01
        %v657 = vmul.f32 %v639, 0.01
        %v658 = vmul.f32 %v642, 0.01
        %v659 = vmul.f32 %v644, 0.01
        %v660 = vmul.f32 %v647, 0.01
        %v661 = vmul.f32 %v649, 0.01
        %v662 = vmul.f32 %v652, 0.01
        %v663 = vmul.f32 %v654, 0.01
        %v664 = vmax.f32 %v637, %v656
        %v665 = vmax.f32 %v639, %v657
        %v666 = vmax.f32 %v642, %v658
        %v667 = vmax.f32 %v644, %v659
        %v668 = vmax.f32 %v647, %v660
        %v669 = vmax.f32 %v649, %v661
        %v670 = vmax.f32 %v652, %v662
        %v671 = vmax.f32 %v654, %v663
        // Predicated region
        $region101: #{tpu_custom_call.1} parent=71 // pred_check
          %p672 = pneg %p536
        $region102: #{tpu_custom_call.1} parent=71 // pred_check_branch
          %674 = sbr.rel (%p672) target = $region104
        $region103: #{tpu_custom_call.1} parent=71 // pred_region
          %v675 = vld [vmem:[#allocation2] sm:$0x1]
          %vm676 = vcmask 523264
          %v678 = vsel %vm676, %v558, 0
          %680 = vmatpush.msra.mxu0 0.0
          %681 = vmatpush.msra.mxu0 0.0
          %682 = vmatpush.msra.mxu0 0.0
          %683 = vmatpush.msra.mxu0 0.0
          %684 = vmatpush.msra.mxu0 0.0
          %685 = vmatpush.msra.mxu0 0.0
          %686 = vmatpush.msra.mxu0 0.0
          %687 = vmatpush.msra.mxu0 0.0
          %688 = vmatpush.msra.mxu0 %v671
          %689 = vmatpush.msra.mxu0 %v670
          %690 = vmatpush.msra.mxu0 %v669
          %691 = vmatpush.msra.mxu0 %v668
          %692 = vmatpush.msra.mxu0 %v667
          %693 = vmatpush.msra.mxu0 %v666
          %694 = vmatpush.msra.mxu0 %v665
          %695 = vmatpush.msra.mxu0 %v664
          %696 = vmatmul.f32.gmra.mxu0 %v678
          %v697 = vpop.f32.mrf.mxu0
          %v698 = vadd.f32 0.0, %v697
          %699 = vdwg.mxu0
          %v700 = vadd.f32 %v675, %v698
          %701 = vst [vmem:[#allocation2] sm:$0x1] %v700
          %v702 = vld [vmem:[#allocation3] sm:$0x1]
          %v703 = vmul.f32 %v664, %v664
          %v704 = vmul.f32 %v665, %v665
          %v705 = vmul.f32 %v666, %v666
          %v706 = vmul.f32 %v667, %v667
          %v707 = vmul.f32 %v668, %v668
          %v708 = vmul.f32 %v669, %v669
          %v709 = vmul.f32 %v670, %v670
          %v710 = vmul.f32 %v671, %v671
          %711 = vmatpush.msra.mxu0 0.0
          %712 = vmatpush.msra.mxu0 0.0
          %713 = vmatpush.msra.mxu0 0.0
          %714 = vmatpush.msra.mxu0 0.0
          %715 = vmatpush.msra.mxu0 0.0
          %716 = vmatpush.msra.mxu0 0.0
          %717 = vmatpush.msra.mxu0 0.0
          %718 = vmatpush.msra.mxu0 0.0
          %719 = vmatpush.msra.mxu0 %v710
          %720 = vmatpush.msra.mxu0 %v709
          %721 = vmatpush.msra.mxu0 %v708
          %722 = vmatpush.msra.mxu0 %v707
          %723 = vmatpush.msra.mxu0 %v706
          %724 = vmatpush.msra.mxu0 %v705
          %725 = vmatpush.msra.mxu0 %v704
          %726 = vmatpush.msra.mxu0 %v703
          %727 = vmatmul.f32.gmra.mxu0 %v678
          %v728 = vpop.f32.mrf.mxu0
          %v729 = vadd.f32 0.0, %v728
          %730 = vdwg.mxu0
          %v731 = vadd.f32 %v702, %v729
          %732 = vst [vmem:[#allocation3] sm:$0x1] %v731
          %733 = vst [vmem:[#allocation17] sm:$0xff] 0.0
          %734 = vst [vmem:[#allocation17 + $0x8] sm:$0xff] 0.0
          %735 = vst [vmem:[#allocation17 + $0x10] sm:$0xff] 0.0
          %736 = vst [vmem:[#allocation17 + $0x18] sm:$0xff] 0.0
          %737 = vst [vmem:[#allocation17 + $0x20] sm:$0xff] 0.0
          %738 = vst [vmem:[#allocation17 + $0x28] sm:$0xff] 0.0
          %739 = vst [vmem:[#allocation17 + $0x30] sm:$0xff] 0.0
          %740 = vst [vmem:[#allocation17 + $0x38] sm:$0xff] 0.0
        $region104: #{tpu_custom_call.1} parent=71 // pred_fallthru
          _
        %p741 = scmp.eq.s32.totalorder %s33, 1
        // Predicated region
        $region105: #{tpu_custom_call.1} parent=71 // pred_check
          %p742 = pneg %p741
        $region106: #{tpu_custom_call.1} parent=71 // pred_check_branch
          %744 = sbr.rel (%p742) target = $region108
        $region107: #{tpu_custom_call.1} parent=71 // pred_region
          %v745 = vld [vmem:[#allocation2] sm:$0x1]
          %v746 = vld [vmem:[#allocation3] sm:$0x1]
          %v747 = vld [vmem:[%s5] sm:$0x1]
          %v748 = vld [vmem:[%s6] sm:$0x1]
          %v749 = vmul.f32 %v745, %v745
          %v750 = vsub.f32 %v746, %v749
          %v751 = vmax.f32 %v750, 0.0
          %v752 = vadd.f32 %v751, 1e-05
          %v753 = vrsqrt.pop %v752
          %v754 = vmul.f32 %v753, %v752
          %v755 = vmul.f32 %v754, %v753
          %v756 = vmul.f32 0.5, %v755
          %v757 = vsub.f32 1.5, %v756
          %v758 = vmul.f32 %v753, %v757
          %vm759 = vweird.f32 %v752
          %vm760 = vweird.f32 %v753
          %vm761 = vmor %vm759, %vm760
          %v762 = vsel %vm761, %v753, %v758
          %v763 = vmul.f32 %v762, %v747
          %v764 = vmul.f32 %v745, %v763
          %v765 = vsub.f32 %v748, %v764
          %v767 = vperm.slane %v763, 0
          %v769 = vmul.f32 %v664, %v767
          %v770 = vmul.f32 %v665, %v767
          %v771 = vmul.f32 %v666, %v767
          %v772 = vmul.f32 %v667, %v767
          %v773 = vmul.f32 %v668, %v767
          %v774 = vmul.f32 %v669, %v767
          %v775 = vmul.f32 %v670, %v767
          %v776 = vmul.f32 %v671, %v767
          %v778 = vperm.slane %v765, 0
          %v780 = vadd.f32 %v769, %v778
          %v781 = vadd.f32 %v770, %v778
          %v782 = vadd.f32 %v771, %v778
          %v783 = vadd.f32 %v772, %v778
          %v784 = vadd.f32 %v773, %v778
          %v785 = vadd.f32 %v774, %v778
          %v786 = vadd.f32 %v775, %v778
          %v787 = vadd.f32 %v776, %v778
          %v788 = vpack.c.bf16 %v781, %v780
          %v789 = vpack.c.bf16 %v783, %v782
          %v790 = vpack.c.bf16 %v785, %v784
          %v791 = vpack.c.bf16 %v787, %v786
          %v792 = vld [vmem:[#allocation14] sm:$0xf]
          %v793 = vld [vmem:[#allocation14 + $0x4] sm:$0xf]
          %v794 = vld [vmem:[#allocation14 + $0x8] sm:$0xf]
          %v795 = vld [vmem:[#allocation14 + $0xc] sm:$0xf]
          %v796 = vld [vmem:[#allocation14 + $0x10] sm:$0xf]
          %v797 = vld [vmem:[#allocation14 + $0x14] sm:$0xf]
          %v798 = vld [vmem:[#allocation14 + $0x18] sm:$0xf]
          %v799 = vld [vmem:[#allocation14 + $0x1c] sm:$0xf]
          %v800 = vld [vmem:[#allocation14 + $0x20] sm:$0xf]
          %v801 = vld [vmem:[#allocation14 + $0x24] sm:$0xf]
          %v802 = vld [vmem:[#allocation14 + $0x28] sm:$0xf]
          %v803 = vld [vmem:[#allocation14 + $0x2c] sm:$0xf]
          %v804 = vld [vmem:[#allocation14 + $0x30] sm:$0xf]
          %v805 = vld [vmem:[#allocation14 + $0x34] sm:$0xf]
          %v806 = vld [vmem:[#allocation14 + $0x38] sm:$0xf]
          %v807 = vld [vmem:[#allocation14 + $0x3c] sm:$0xf]
          %v808 = vld [vmem:[%s8] sm:$0x1]
          %v810 = vperm.slane %v808, 0
          %v828 = vunpack.c.l.b16 %v792
          %v829 = vunpack.c.l.b16 %v793
          %v830 = vunpack.c.l.b16 %v794
          %v831 = vunpack.c.l.b16 %v795
          %v832 = vunpack.c.l.b16 %v796
          %v833 = vunpack.c.l.b16 %v797
          %v834 = vunpack.c.l.b16 %v798
          %v835 = vunpack.c.l.b16 %v799
          %v836 = vunpack.c.l.b16 %v800
          %v837 = vunpack.c.l.b16 %v801
          %v838 = vunpack.c.l.b16 %v802
          %v839 = vunpack.c.l.b16 %v803
          %v840 = vunpack.c.l.b16 %v804
          %v841 = vunpack.c.l.b16 %v805
          %v842 = vunpack.c.l.b16 %v806
          %v843 = vunpack.c.l.b16 %v807
          %v844 = vpack.c.b16 %v829, %v828
          %v845 = vpack.c.b16 %v831, %v830
          %v846 = vpack.c.b16 %v833, %v832
          %v847 = vpack.c.b16 %v835, %v834
          %v848 = vpack.c.b16 %v837, %v836
          %v849 = vpack.c.b16 %v839, %v838
          %v850 = vpack.c.b16 %v841, %v840
          %v851 = vpack.c.b16 %v843, %v842
          %860 = vmatpush.bf16.msra.mxu0 %v851
          %861 = vmatpush.bf16.msra.mxu0 %v850
          %862 = vmatpush.bf16.msra.mxu0 %v849
          %863 = vmatpush.bf16.msra.mxu0 %v848
          %864 = vmatpush.bf16.msra.mxu0 %v847
          %865 = vmatpush.bf16.msra.mxu0 %v846
          %866 = vmatpush.bf16.msra.mxu0 %v845
          %867 = vmatpush.bf16.msra.mxu0 %v844
          %868 = vmatmul.bf16.gmra.mxu0 %v788
          %v869 = vpop.f32.mrf.mxu0
          %v870 = vadd.f32 %v810, %v869
          %v871 = vpop.f32.mrf.mxu0
          %v872 = vadd.f32 %v810, %v871
          %873 = vmatmul.bf16.gmra.mxu0 %v789
          %v874 = vpop.f32.mrf.mxu0
          %v875 = vadd.f32 %v810, %v874
          %v876 = vpop.f32.mrf.mxu0
          %v877 = vadd.f32 %v810, %v876
          %878 = vmatmul.bf16.gmra.mxu0 %v790
          %v879 = vpop.f32.mrf.mxu0
          %v880 = vadd.f32 %v810, %v879
          %v881 = vpop.f32.mrf.mxu0
          %v882 = vadd.f32 %v810, %v881
          %883 = vmatmul.bf16.gmra.mxu0 %v791
          %v884 = vpop.f32.mrf.mxu0
          %v885 = vadd.f32 %v810, %v884
          %v886 = vpop.f32.mrf.mxu0
          %v887 = vadd.f32 %v810, %v886
          %888 = vdwg.mxu0
          %v889 = vmul.f32 %v870, 0.01
          %v890 = vmul.f32 %v872, 0.01
          %v891 = vmul.f32 %v875, 0.01
          %v892 = vmul.f32 %v877, 0.01
          %v893 = vmul.f32 %v880, 0.01
          %v894 = vmul.f32 %v882, 0.01
          %v895 = vmul.f32 %v885, 0.01
          %v896 = vmul.f32 %v887, 0.01
          %v897 = vmax.f32 %v870, %v889
          %v898 = vmax.f32 %v872, %v890
          %v899 = vmax.f32 %v875, %v891
          %v900 = vmax.f32 %v877, %v892
          %v901 = vmax.f32 %v880, %v893
          %v902 = vmax.f32 %v882, %v894
          %v903 = vmax.f32 %v885, %v895
          %v904 = vmax.f32 %v887, %v896
          %v905 = vld [vmem:[#allocation4] sm:$0x1]
          %vm906 = vcmask 523264
          %v908 = vsel %vm906, %v558, 0
          %910 = vmatpush.msra.mxu0 0.0
          %911 = vmatpush.msra.mxu0 0.0
          %912 = vmatpush.msra.mxu0 0.0
          %913 = vmatpush.msra.mxu0 0.0
          %914 = vmatpush.msra.mxu0 0.0
          %915 = vmatpush.msra.mxu0 0.0
          %916 = vmatpush.msra.mxu0 0.0
          %917 = vmatpush.msra.mxu0 0.0
          %918 = vmatpush.msra.mxu0 %v904
          %919 = vmatpush.msra.mxu0 %v903
          %920 = vmatpush.msra.mxu0 %v902
          %921 = vmatpush.msra.mxu0 %v901
          %922 = vmatpush.msra.mxu0 %v900
          %923 = vmatpush.msra.mxu0 %v899
          %924 = vmatpush.msra.mxu0 %v898
          %925 = vmatpush.msra.mxu0 %v897
          %926 = vmatmul.f32.gmra.mxu0 %v908
          %v927 = vpop.f32.mrf.mxu0
          %v928 = vadd.f32 0.0, %v927
          %929 = vdwg.mxu0
          %v930 = vadd.f32 %v905, %v928
          %931 = vst [vmem:[#allocation4] sm:$0x1] %v930
          %v932 = vld [vmem:[#allocation5] sm:$0x1]
          %v933 = vmul.f32 %v897, %v897
          %v934 = vmul.f32 %v898, %v898
          %v935 = vmul.f32 %v899, %v899
          %v936 = vmul.f32 %v900, %v900
          %v937 = vmul.f32 %v901, %v901
          %v938 = vmul.f32 %v902, %v902
          %v939 = vmul.f32 %v903, %v903
          %v940 = vmul.f32 %v904, %v904
          %941 = vmatpush.msra.mxu0 0.0
          %942 = vmatpush.msra.mxu0 0.0
          %943 = vmatpush.msra.mxu0 0.0
          %944 = vmatpush.msra.mxu0 0.0
          %945 = vmatpush.msra.mxu0 0.0
          %946 = vmatpush.msra.mxu0 0.0
          %947 = vmatpush.msra.mxu0 0.0
          %948 = vmatpush.msra.mxu0 0.0
          %949 = vmatpush.msra.mxu0 %v940
          %950 = vmatpush.msra.mxu0 %v939
          %951 = vmatpush.msra.mxu0 %v938
          %952 = vmatpush.msra.mxu0 %v937
          %953 = vmatpush.msra.mxu0 %v936
          %954 = vmatpush.msra.mxu0 %v935
          %955 = vmatpush.msra.mxu0 %v934
          %956 = vmatpush.msra.mxu0 %v933
          %957 = vmatmul.f32.gmra.mxu0 %v908
          %v958 = vpop.f32.mrf.mxu0
          %v959 = vadd.f32 0.0, %v958
          %960 = vdwg.mxu0
          %v961 = vadd.f32 %v932, %v959
          %962 = vst [vmem:[#allocation5] sm:$0x1] %v961
          %963 = vst [vmem:[#allocation17] sm:$0xff] 0.0
          %964 = vst [vmem:[#allocation17 + $0x8] sm:$0xff] 0.0
          %965 = vst [vmem:[#allocation17 + $0x10] sm:$0xff] 0.0
          %966 = vst [vmem:[#allocation17 + $0x18] sm:$0xff] 0.0
          %967 = vst [vmem:[#allocation17 + $0x20] sm:$0xff] 0.0
          %968 = vst [vmem:[#allocation17 + $0x28] sm:$0xff] 0.0
          %969 = vst [vmem:[#allocation17 + $0x30] sm:$0xff] 0.0
          %970 = vst [vmem:[#allocation17 + $0x38] sm:$0xff] 0.0
        $region108: #{tpu_custom_call.1} parent=71 // pred_fallthru
          _
        %p971 = scmp.eq.s32.totalorder %s33, 2
        // Predicated region
        $region109: #{tpu_custom_call.1} parent=71 // pred_check
          %p972 = pneg %p971
        $region110: #{tpu_custom_call.1} parent=71 // pred_check_branch
          %974 = sbr.rel (%p972) target = $region112
        $region111: #{tpu_custom_call.1} parent=71 // pred_region
          %v975 = vld [vmem:[#allocation2] sm:$0x1]
          %v976 = vld [vmem:[#allocation3] sm:$0x1]
          %v977 = vld [vmem:[%s5] sm:$0x1]
          %v978 = vld [vmem:[%s6] sm:$0x1]
          %v979 = vmul.f32 %v975, %v975
          %v980 = vsub.f32 %v976, %v979
          %v981 = vmax.f32 %v980, 0.0
          %v982 = vadd.f32 %v981, 1e-05
          %v983 = vrsqrt.pop %v982
          %v984 = vmul.f32 %v983, %v982
          %v985 = vmul.f32 %v984, %v983
          %v986 = vmul.f32 0.5, %v985
          %v987 = vsub.f32 1.5, %v986
          %v988 = vmul.f32 %v983, %v987
          %vm989 = vweird.f32 %v982
          %vm990 = vweird.f32 %v983
          %vm991 = vmor %vm989, %vm990
          %v992 = vsel %vm991, %v983, %v988
          %v993 = vmul.f32 %v992, %v977
          %v994 = vmul.f32 %v975, %v993
          %v995 = vsub.f32 %v978, %v994
          %v997 = vperm.slane %v993, 0
          %v999 = vmul.f32 %v664, %v997
          %v1000 = vmul.f32 %v665, %v997
          %v1001 = vmul.f32 %v666, %v997
          %v1002 = vmul.f32 %v667, %v997
          %v1003 = vmul.f32 %v668, %v997
          %v1004 = vmul.f32 %v669, %v997
          %v1005 = vmul.f32 %v670, %v997
          %v1006 = vmul.f32 %v671, %v997
          %v1008 = vperm.slane %v995, 0
          %v1010 = vadd.f32 %v999, %v1008
          %v1011 = vadd.f32 %v1000, %v1008
          %v1012 = vadd.f32 %v1001, %v1008
          %v1013 = vadd.f32 %v1002, %v1008
          %v1014 = vadd.f32 %v1003, %v1008
          %v1015 = vadd.f32 %v1004, %v1008
          %v1016 = vadd.f32 %v1005, %v1008
          %v1017 = vadd.f32 %v1006, %v1008
          %v1018 = vpack.c.bf16 %v1011, %v1010
          %v1019 = vpack.c.bf16 %v1013, %v1012
          %v1020 = vpack.c.bf16 %v1015, %v1014
          %v1021 = vpack.c.bf16 %v1017, %v1016
          %v1022 = vld [vmem:[#allocation14] sm:$0xf]
          %v1023 = vld [vmem:[#allocation14 + $0x4] sm:$0xf]
          %v1024 = vld [vmem:[#allocation14 + $0x8] sm:$0xf]
          %v1025 = vld [vmem:[#allocation14 + $0xc] sm:$0xf]
          %v1026 = vld [vmem:[#allocation14 + $0x10] sm:$0xf]
          %v1027 = vld [vmem:[#allocation14 + $0x14] sm:$0xf]
          %v1028 = vld [vmem:[#allocation14 + $0x18] sm:$0xf]
          %v1029 = vld [vmem:[#allocation14 + $0x1c] sm:$0xf]
          %v1030 = vld [vmem:[#allocation14 + $0x20] sm:$0xf]
          %v1031 = vld [vmem:[#allocation14 + $0x24] sm:$0xf]
          %v1032 = vld [vmem:[#allocation14 + $0x28] sm:$0xf]
          %v1033 = vld [vmem:[#allocation14 + $0x2c] sm:$0xf]
          %v1034 = vld [vmem:[#allocation14 + $0x30] sm:$0xf]
          %v1035 = vld [vmem:[#allocation14 + $0x34] sm:$0xf]
          %v1036 = vld [vmem:[#allocation14 + $0x38] sm:$0xf]
          %v1037 = vld [vmem:[#allocation14 + $0x3c] sm:$0xf]
          %v1038 = vld [vmem:[%s8] sm:$0x1]
          %v1040 = vperm.slane %v1038, 0
          %v1058 = vunpack.c.l.b16 %v1022
          %v1059 = vunpack.c.l.b16 %v1023
          %v1060 = vunpack.c.l.b16 %v1024
          %v1061 = vunpack.c.l.b16 %v1025
          %v1062 = vunpack.c.l.b16 %v1026
          %v1063 = vunpack.c.l.b16 %v1027
          %v1064 = vunpack.c.l.b16 %v1028
          %v1065 = vunpack.c.l.b16 %v1029
          %v1066 = vunpack.c.l.b16 %v1030
          %v1067 = vunpack.c.l.b16 %v1031
          %v1068 = vunpack.c.l.b16 %v1032
          %v1069 = vunpack.c.l.b16 %v1033
          %v1070 = vunpack.c.l.b16 %v1034
          %v1071 = vunpack.c.l.b16 %v1035
          %v1072 = vunpack.c.l.b16 %v1036
          %v1073 = vunpack.c.l.b16 %v1037
          %v1074 = vpack.c.b16 %v1059, %v1058
          %v1075 = vpack.c.b16 %v1061, %v1060
          %v1076 = vpack.c.b16 %v1063, %v1062
          %v1077 = vpack.c.b16 %v1065, %v1064
          %v1078 = vpack.c.b16 %v1067, %v1066
          %v1079 = vpack.c.b16 %v1069, %v1068
          %v1080 = vpack.c.b16 %v1071, %v1070
          %v1081 = vpack.c.b16 %v1073, %v1072
          %1090 = vmatpush.bf16.msra.mxu0 %v1081
          %1091 = vmatpush.bf16.msra.mxu0 %v1080
          %1092 = vmatpush.bf16.msra.mxu0 %v1079
          %1093 = vmatpush.bf16.msra.mxu0 %v1078
          %1094 = vmatpush.bf16.msra.mxu0 %v1077
          %1095 = vmatpush.bf16.msra.mxu0 %v1076
          %1096 = vmatpush.bf16.msra.mxu0 %v1075
          %1097 = vmatpush.bf16.msra.mxu0 %v1074
          %1098 = vmatmul.bf16.gmra.mxu0 %v1018
          %v1099 = vpop.f32.mrf.mxu0
          %v1100 = vadd.f32 %v1040, %v1099
          %v1101 = vpop.f32.mrf.mxu0
          %v1102 = vadd.f32 %v1040, %v1101
          %1103 = vmatmul.bf16.gmra.mxu0 %v1019
          %v1104 = vpop.f32.mrf.mxu0
          %v1105 = vadd.f32 %v1040, %v1104
          %v1106 = vpop.f32.mrf.mxu0
          %v1107 = vadd.f32 %v1040, %v1106
          %1108 = vmatmul.bf16.gmra.mxu0 %v1020
          %v1109 = vpop.f32.mrf.mxu0
          %v1110 = vadd.f32 %v1040, %v1109
          %v1111 = vpop.f32.mrf.mxu0
          %v1112 = vadd.f32 %v1040, %v1111
          %1113 = vmatmul.bf16.gmra.mxu0 %v1021
          %v1114 = vpop.f32.mrf.mxu0
          %v1115 = vadd.f32 %v1040, %v1114
          %v1116 = vpop.f32.mrf.mxu0
          %v1117 = vadd.f32 %v1040, %v1116
          %1118 = vdwg.mxu0
          %v1119 = vmul.f32 %v1100, 0.01
          %v1120 = vmul.f32 %v1102, 0.01
          %v1121 = vmul.f32 %v1105, 0.01
          %v1122 = vmul.f32 %v1107, 0.01
          %v1123 = vmul.f32 %v1110, 0.01
          %v1124 = vmul.f32 %v1112, 0.01
          %v1125 = vmul.f32 %v1115, 0.01
          %v1126 = vmul.f32 %v1117, 0.01
          %v1127 = vmax.f32 %v1100, %v1119
          %v1128 = vmax.f32 %v1102, %v1120
          %v1129 = vmax.f32 %v1105, %v1121
          %v1130 = vmax.f32 %v1107, %v1122
          %v1131 = vmax.f32 %v1110, %v1123
          %v1132 = vmax.f32 %v1112, %v1124
          %v1133 = vmax.f32 %v1115, %v1125
          %v1134 = vmax.f32 %v1117, %v1126
          %v1135 = vld [vmem:[#allocation4] sm:$0x1]
          %v1136 = vld [vmem:[#allocation5] sm:$0x1]
          %v1137 = vld [vmem:[%s9] sm:$0x1]
          %v1138 = vld [vmem:[%s10] sm:$0x1]
          %v1139 = vmul.f32 %v1135, %v1135
          %v1140 = vsub.f32 %v1136, %v1139
          %v1141 = vmax.f32 %v1140, 0.0
          %v1142 = vadd.f32 %v1141, 1e-05
          %v1143 = vrsqrt.pop %v1142
          %v1144 = vmul.f32 %v1143, %v1142
          %v1145 = vmul.f32 %v1144, %v1143
          %v1146 = vmul.f32 0.5, %v1145
          %v1147 = vsub.f32 1.5, %v1146
          %v1148 = vmul.f32 %v1143, %v1147
          %vm1149 = vweird.f32 %v1142
          %vm1150 = vweird.f32 %v1143
          %vm1151 = vmor %vm1149, %vm1150
          %v1152 = vsel %vm1151, %v1143, %v1148
          %v1153 = vmul.f32 %v1152, %v1137
          %v1154 = vmul.f32 %v1135, %v1153
          %v1155 = vsub.f32 %v1138, %v1154
          %v1157 = vperm.slane %v1153, 0
          %v1159 = vmul.f32 %v1127, %v1157
          %v1160 = vmul.f32 %v1128, %v1157
          %v1161 = vmul.f32 %v1129, %v1157
          %v1162 = vmul.f32 %v1130, %v1157
          %v1163 = vmul.f32 %v1131, %v1157
          %v1164 = vmul.f32 %v1132, %v1157
          %v1165 = vmul.f32 %v1133, %v1157
          %v1166 = vmul.f32 %v1134, %v1157
          %v1168 = vperm.slane %v1155, 0
          %v1170 = vadd.f32 %v1159, %v1168
          %v1171 = vadd.f32 %v1160, %v1168
          %v1172 = vadd.f32 %v1161, %v1168
          %v1173 = vadd.f32 %v1162, %v1168
          %v1174 = vadd.f32 %v1163, %v1168
          %v1175 = vadd.f32 %v1164, %v1168
          %v1176 = vadd.f32 %v1165, %v1168
          %v1177 = vadd.f32 %v1166, %v1168
          %v1178 = vpack.c.bf16 %v1171, %v1170
          %v1179 = vpack.c.bf16 %v1173, %v1172
          %v1180 = vpack.c.bf16 %v1175, %v1174
          %v1181 = vpack.c.bf16 %v1177, %v1176
          %v1182 = vld [vmem:[#allocation15] sm:$0xff]
          %v1183 = vld [vmem:[#allocation15 + $0x8] sm:$0xff]
          %v1184 = vld [vmem:[#allocation15 + $0x10] sm:$0xff]
          %v1185 = vld [vmem:[#allocation15 + $0x18] sm:$0xff]
          %v1186 = vld [vmem:[#allocation15 + $0x20] sm:$0xff]
          %v1187 = vld [vmem:[#allocation15 + $0x28] sm:$0xff]
          %v1188 = vld [vmem:[#allocation15 + $0x30] sm:$0xff]
          %v1189 = vld [vmem:[#allocation15 + $0x38] sm:$0xff]
          %v1190 = vld [vmem:[#allocation15 + $0x40] sm:$0xff]
          %v1191 = vld [vmem:[#allocation15 + $0x48] sm:$0xff]
          %v1192 = vld [vmem:[#allocation15 + $0x50] sm:$0xff]
          %v1193 = vld [vmem:[#allocation15 + $0x58] sm:$0xff]
          %v1194 = vld [vmem:[#allocation15 + $0x60] sm:$0xff]
          %v1195 = vld [vmem:[#allocation15 + $0x68] sm:$0xff]
          %v1196 = vld [vmem:[#allocation15 + $0x70] sm:$0xff]
          %v1197 = vld [vmem:[#allocation15 + $0x78] sm:$0xff]
          %v1198 = vld [vmem:[%s12] sm:$0x3]
          %v1200 = vperm.slane %v1198, 0
          %v1201 = vperm.slane %v1198, 1
          %v1220 = vunpack.c.l.b16 %v1182
          %v1221 = vunpack.c.h.b16 %v1182
          %v1222 = vunpack.c.l.b16 %v1183
          %v1223 = vunpack.c.h.b16 %v1183
          %v1224 = vunpack.c.l.b16 %v1184
          %v1225 = vunpack.c.h.b16 %v1184
          %v1226 = vunpack.c.l.b16 %v1185
          %v1227 = vunpack.c.h.b16 %v1185
          %v1228 = vunpack.c.l.b16 %v1186
          %v1229 = vunpack.c.h.b16 %v1186
          %v1230 = vunpack.c.l.b16 %v1187
          %v1231 = vunpack.c.h.b16 %v1187
          %v1232 = vunpack.c.l.b16 %v1188
          %v1233 = vunpack.c.h.b16 %v1188
          %v1234 = vunpack.c.l.b16 %v1189
          %v1235 = vunpack.c.h.b16 %v1189
          %v1236 = vunpack.c.l.b16 %v1190
          %v1237 = vunpack.c.h.b16 %v1190
          %v1238 = vunpack.c.l.b16 %v1191
          %v1239 = vunpack.c.h.b16 %v1191
          %v1240 = vunpack.c.l.b16 %v1192
          %v1241 = vunpack.c.h.b16 %v1192
          %v1242 = vunpack.c.l.b16 %v1193
          %v1243 = vunpack.c.h.b16 %v1193
          %v1244 = vunpack.c.l.b16 %v1194
          %v1245 = vunpack.c.h.b16 %v1194
          %v1246 = vunpack.c.l.b16 %v1195
          %v1247 = vunpack.c.h.b16 %v1195
          %v1248 = vunpack.c.l.b16 %v1196
          %v1249 = vunpack.c.h.b16 %v1196
          %v1250 = vunpack.c.l.b16 %v1197
          %v1251 = vunpack.c.h.b16 %v1197
          %v1252 = vpack.c.b16 %v1222, %v1220
          %v1253 = vpack.c.b16 %v1223, %v1221
          %v1254 = vpack.c.b16 %v1226, %v1224
          %v1255 = vpack.c.b16 %v1227, %v1225
          %v1256 = vpack.c.b16 %v1230, %v1228
          %v1257 = vpack.c.b16 %v1231, %v1229
          %v1258 = vpack.c.b16 %v1234, %v1232
          %v1259 = vpack.c.b16 %v1235, %v1233
          %v1260 = vpack.c.b16 %v1238, %v1236
          %v1261 = vpack.c.b16 %v1239, %v1237
          %v1262 = vpack.c.b16 %v1242, %v1240
          %v1263 = vpack.c.b16 %v1243, %v1241
          %v1264 = vpack.c.b16 %v1246, %v1244
          %v1265 = vpack.c.b16 %v1247, %v1245
          %v1266 = vpack.c.b16 %v1250, %v1248
          %v1267 = vpack.c.b16 %v1251, %v1249
          %1284 = vmatpush.bf16.msra.mxu0 %v1266
          %1285 = vmatpush.bf16.msra.mxu0 %v1264
          %1286 = vmatpush.bf16.msra.mxu0 %v1262
          %1287 = vmatpush.bf16.msra.mxu0 %v1260
          %1288 = vmatpush.bf16.msra.mxu0 %v1258
          %1289 = vmatpush.bf16.msra.mxu0 %v1256
          %1290 = vmatpush.bf16.msra.mxu0 %v1254
          %1291 = vmatpush.bf16.msra.mxu0 %v1252
          %1292 = vmatmul.bf16.gmra.mxu0 %v1178
          %v1293 = vpop.f32.mrf.mxu0
          %v1294 = vadd.f32 %v1200, %v1293
          %v1295 = vpop.f32.mrf.mxu0
          %v1296 = vadd.f32 %v1200, %v1295
          %1297 = vmatmul.bf16.gmra.mxu0 %v1179
          %v1298 = vpop.f32.mrf.mxu0
          %v1299 = vadd.f32 %v1200, %v1298
          %v1300 = vpop.f32.mrf.mxu0
          %v1301 = vadd.f32 %v1200, %v1300
          %1302 = vmatmul.bf16.gmra.mxu0 %v1180
          %v1303 = vpop.f32.mrf.mxu0
          %v1304 = vadd.f32 %v1200, %v1303
          %v1305 = vpop.f32.mrf.mxu0
          %v1306 = vadd.f32 %v1200, %v1305
          %1307 = vmatmul.bf16.gmra.mxu0 %v1181
          %v1308 = vpop.f32.mrf.mxu0
          %v1309 = vadd.f32 %v1200, %v1308
          %v1310 = vpop.f32.mrf.mxu0
          %v1311 = vadd.f32 %v1200, %v1310
          %1312 = vdwg.mxu0
          %1313 = vmatpush.bf16.msra.mxu0 %v1267
          %1314 = vmatpush.bf16.msra.mxu0 %v1265
          %1315 = vmatpush.bf16.msra.mxu0 %v1263
          %1316 = vmatpush.bf16.msra.mxu0 %v1261
          %1317 = vmatpush.bf16.msra.mxu0 %v1259
          %1318 = vmatpush.bf16.msra.mxu0 %v1257
          %1319 = vmatpush.bf16.msra.mxu0 %v1255
          %1320 = vmatpush.bf16.msra.mxu0 %v1253
          %1321 = vmatmul.bf16.gmra.mxu0 %v1178
          %v1322 = vpop.f32.mrf.mxu0
          %v1323 = vadd.f32 %v1201, %v1322
          %v1324 = vpop.f32.mrf.mxu0
          %v1325 = vadd.f32 %v1201, %v1324
          %1326 = vmatmul.bf16.gmra.mxu0 %v1179
          %v1327 = vpop.f32.mrf.mxu0
          %v1328 = vadd.f32 %v1201, %v1327
          %v1329 = vpop.f32.mrf.mxu0
          %v1330 = vadd.f32 %v1201, %v1329
          %1331 = vmatmul.bf16.gmra.mxu0 %v1180
          %v1332 = vpop.f32.mrf.mxu0
          %v1333 = vadd.f32 %v1201, %v1332
          %v1334 = vpop.f32.mrf.mxu0
          %v1335 = vadd.f32 %v1201, %v1334
          %1336 = vmatmul.bf16.gmra.mxu0 %v1181
          %v1337 = vpop.f32.mrf.mxu0
          %v1338 = vadd.f32 %v1201, %v1337
          %v1339 = vpop.f32.mrf.mxu0
          %v1340 = vadd.f32 %v1201, %v1339
          %1341 = vdwg.mxu0
          %v1342 = vtanh.pop %v1323
          %v1343 = vtanh.pop %v1325
          %v1344 = vtanh.pop %v1328
          %v1345 = vtanh.pop %v1330
          %v1346 = vtanh.pop %v1333
          %v1347 = vtanh.pop %v1335
          %v1348 = vtanh.pop %v1338
          %v1349 = vtanh.pop %v1340
          %v1350 = vsub.f32 %v546, %v1294
          %v1351 = vsub.f32 %v547, %v1296
          %v1352 = vsub.f32 %v548, %v1299
          %v1353 = vsub.f32 %v549, %v1301
          %v1354 = vsub.f32 %v550, %v1304
          %v1355 = vsub.f32 %v551, %v1306
          %v1356 = vsub.f32 %v552, %v1309
          %v1357 = vsub.f32 %v553, %v1311
          %v1358 = vsub.f32 0.0, %v1342
          %v1359 = vsub.f32 0.0, %v1343
          %v1360 = vsub.f32 0.0, %v1344
          %v1361 = vsub.f32 0.0, %v1345
          %v1362 = vsub.f32 0.0, %v1346
          %v1363 = vsub.f32 0.0, %v1347
          %v1364 = vsub.f32 0.0, %v1348
          %v1365 = vsub.f32 0.0, %v1349
          %v1366 = vmul.f32 %v1358, 1.442695
          %v1367 = vpow.pop %v1366
          %v1368 = vmul.f32 %v1359, 1.442695
          %v1369 = vpow.pop %v1368
          %v1370 = vmul.f32 %v1360, 1.442695
          %v1371 = vpow.pop %v1370
          %v1372 = vmul.f32 %v1361, 1.442695
          %v1373 = vpow.pop %v1372
          %v1374 = vmul.f32 %v1362, 1.442695
          %v1375 = vpow.pop %v1374
          %v1376 = vmul.f32 %v1363, 1.442695
          %v1377 = vpow.pop %v1376
          %v1378 = vmul.f32 %v1364, 1.442695
          %v1379 = vpow.pop %v1378
          %v1380 = vmul.f32 %v1365, 1.442695
          %v1381 = vpow.pop %v1380
          %v1382 = vmul.f32 %v1350, %v1367
          %v1383 = vmul.f32 %v1351, %v1369
          %v1384 = vmul.f32 %v1352, %v1371
          %v1385 = vmul.f32 %v1353, %v1373
          %v1386 = vmul.f32 %v1354, %v1375
          %v1387 = vmul.f32 %v1355, %v1377
          %v1388 = vmul.f32 %v1356, %v1379
          %v1389 = vmul.f32 %v1357, %v1381
          %1390 = vadd.xlane.f32.xlu0 %v1342
          %v1391 = vpop.xlane.xlu0 %1390
          %1392 = vadd.xlane.f32.xlu0 %v1343
          %v1393 = vpop.xlane.xlu0 %1392
          %1394 = vadd.xlane.f32.xlu0 %v1344
          %v1395 = vpop.xlane.xlu0 %1394
          %1396 = vadd.xlane.f32.xlu0 %v1345
          %v1397 = vpop.xlane.xlu0 %1396
          %1398 = vadd.xlane.f32.xlu0 %v1346
          %v1399 = vpop.xlane.xlu0 %1398
          %1400 = vadd.xlane.f32.xlu0 %v1347
          %v1401 = vpop.xlane.xlu0 %1400
          %1402 = vadd.xlane.f32.xlu0 %v1348
          %v1403 = vpop.xlane.xlu0 %1402
          %1404 = vadd.xlane.f32.xlu0 %v1349
          %v1405 = vpop.xlane.xlu0 %1404
          %v1406 = vsub.f32 0.0, %v1391
          %v1407 = vsub.f32 0.0, %v1393
          %v1408 = vsub.f32 0.0, %v1395
          %v1409 = vsub.f32 0.0, %v1397
          %v1410 = vsub.f32 0.0, %v1399
          %v1411 = vsub.f32 0.0, %v1401
          %v1412 = vsub.f32 0.0, %v1403
          %v1413 = vsub.f32 0.0, %v1405
          %v1414 = vld [vmem:[%s2] sm:$0x1]
          %v1416 = vperm.slane %v1414, 0
          %v1418 = vmul.f32 %v1406, %v1416
          %v1419 = vmul.f32 %v1407, %v1416
          %v1420 = vmul.f32 %v1408, %v1416
          %v1421 = vmul.f32 %v1409, %v1416
          %v1422 = vmul.f32 %v1410, %v1416
          %v1423 = vmul.f32 %v1411, %v1416
          %v1424 = vmul.f32 %v1412, %v1416
          %v1425 = vmul.f32 %v1413, %v1416
          %v1426 = vadd.f32 %v1382, %v1418
          %v1427 = vadd.f32 %v1383, %v1419
          %v1428 = vadd.f32 %v1384, %v1420
          %v1429 = vadd.f32 %v1385, %v1421
          %v1430 = vadd.f32 %v1386, %v1422
          %v1431 = vadd.f32 %v1387, %v1423
          %v1432 = vadd.f32 %v1388, %v1424
          %v1433 = vadd.f32 %v1389, %v1425
          %1434 = vst [vmem:[#allocation17] sm:$0xff] %v1426
          %1435 = vst [vmem:[#allocation17 + $0x8] sm:$0xff] %v1427
          %1436 = vst [vmem:[#allocation17 + $0x10] sm:$0xff] %v1428
          %1437 = vst [vmem:[#allocation17 + $0x18] sm:$0xff] %v1429
          %1438 = vst [vmem:[#allocation17 + $0x20] sm:$0xff] %v1430
          %1439 = vst [vmem:[#allocation17 + $0x28] sm:$0xff] %v1431
          %1440 = vst [vmem:[#allocation17 + $0x30] sm:$0xff] %v1432
          %1441 = vst [vmem:[#allocation17 + $0x38] sm:$0xff] %v1433
        $region112: #{tpu_custom_call.1} parent=71 // pred_fallthru
          _
        // Predicated region
        $region113: #{tpu_custom_call.1} parent=71 // pred_check
          %p1442 = pneg %p342
        $region114: #{tpu_custom_call.1} parent=71 // pred_check_branch
          %1444 = sbr.rel (%p1442) target = $region116
        $region115: #{tpu_custom_call.1} parent=71 // pred_region
          %s1445 = smul.u32 8, %s34
          %1447 = vsyncadd [#allocation8], 0
          %s1448 = smul.addr %s1445, 8
          %s1449 = scalar_lea.hbm %s13, %s1448
          %s1450 = sshll.u32 [#allocation17], 4
          %s1451 = int_to_ptr.vmem [resolvable:$true] %s1450
          %s1452 = sshll.u32 %s1449, 4
          %s1453 = int_to_ptr.hbm [resolvable:$true] %s1452
          %1458 = dma.vmem_to_hbm [thread:$0]  %s1451, 1024, %s1453, [#allocation8], 128, 128, 8
        $region116: #{tpu_custom_call.1} parent=71 // pred_fallthru
          _
        // Predicated region
        $region117: #{tpu_custom_call.1} parent=71 // pred_check
          %p1459 = pneg %p342
        $region118: #{tpu_custom_call.1} parent=71 // pred_check_branch
          %1461 = sbr.rel (%p1459) target = $region120
        $region119: #{tpu_custom_call.1} parent=71 // pred_region
          %1463 = dma.done [#allocation8], 1024
        $region120: #{tpu_custom_call.1} parent=71 // pred_fallthru
          _
      $region72: #{tpu_custom_call.1} parent=5 // pred_fallthru
        _
      %p1464 = scmp.le.s32.totalorder 2, %s24
      // Predicated region
      $region121: #{tpu_custom_call.1} parent=5 // pred_check
        %p1465 = pneg %p1464
      $region122: #{tpu_custom_call.1} parent=5 // pred_check_branch
        %1467 = sbr.rel (%p1465) target = $region124
      $region123: #{tpu_custom_call.1} parent=5 // pred_region
        %s1468 = ssub.s32 %s24, 2
      $region124: #{tpu_custom_call.1} parent=5 // pred_fallthru
        _
    $region6: #{tpu_custom_call.1} parent=1 // loop_footer
      %s28 = sadd.s32 1, %s24
    $region7: #{tpu_custom_call.1} parent=1 // loop_footer_branch
      %23 = sbr.rel target = $region3
    $region8: #{tpu_custom_call.1} parent=1 // loop_exit
      _
    %1469 = vsyncpa [#allocation7], 1
    %s1470 = scalar_lea.sflag [#allocation7], 1
    %1471 = vsyncpa %s1470, 1
    %1472 = vsyncpa [#allocation10], 1
    %1473 = vsyncpa [#allocation13], 1
    %1474 = vsyncpa [#allocation16], 1
    %1475 = vsyncpa [#allocation8], 1
    %s1476 = scalar_lea.sflag [#allocation8], 1
    %1477 = vsyncpa %s1476, 1

</llo_original>
